<compile_context>
chip_gen: v7x
topology: tpu7x:2x2x1
jax: 0.10.0
libtpu: 0.0.40
codegen_flags: <defaults>
</compile_context>

<pallas_src>
import functools

import jax
import jax.numpy as jnp
from jax.experimental import pallas as pl
from jax.experimental.pallas import tpu as pltpu


# ----------------------------- Pallas kernel --------------------------------
def _self_attn_layer_kernel(*refs, nhead, head_dim, tq, ln_eps,
                            has_pe, has_kpm, has_attn_mask,
                            compute_dtype, approx_recip):
    it = iter(refs)
    x_ref = next(it)
    pe_ref = next(it) if has_pe else None
    kpm_ref = next(it) if has_kpm else None
    am_ref = next(it) if has_attn_mask else None
    (wqk_ref, bqk_ref, wv_ref, bv_ref, wo_ref, bo_ref, gamma_ref, beta_ref,
     out_ref, q_s, kT_s, v_s) = it

    qi = pl.program_id(1)
    c = nhead * head_dim
    scale = 1.0 / jnp.sqrt(jnp.float32(head_dim))

    # ---- Once per batch element (qi == 0): project Q, K, V for the FULL
    # sequence into resident VMEM scratch (compute_dtype, normally bf16).
    # Q and K share one fused (C, 2C) matmul; 1/sqrt(D) is folded into Q;
    # K is stored transposed (C, N) ONCE so the inner loop never transposes.
    @pl.when(qi == 0)
    def _project_qkv():
        xf = x_ref[0]                                              # (N, C) f32
        qk_in = (xf + pe_ref[0]) if has_pe else xf                 # q = k = x + pe
        qk = jnp.dot(qk_in.astype(compute_dtype), wqk_ref[...],
                     preferred_element_type=jnp.float32) + bqk_ref[...]
        q_s[...] = (qk[:, :c] * scale).astype(compute_dtype)
        kT_s[...] = qk[:, c:].T.astype(compute_dtype)              # (C, N)
        v = jnp.dot(xf.astype(compute_dtype), wv_ref[...],
                    preferred_element_type=jnp.float32) + bv_ref[...]
        v_s[...] = v.astype(compute_dtype)

    # ---- Per query tile: attention over the resident K^T / V.
    q_start = pl.multiple_of(qi * tq, tq)
    q_tile = q_s[pl.ds(q_start, tq), :]                            # (TQ, C)

    # Additive key bias shared by every head (hoisted out of the head loop).
    # The (1, N) key-padding row is broadcast at the add — no (TQ, N) bias tile
    # is built unless an explicit attn_mask is streamed.
    bias = None
    if has_kpm:
        bias = kpm_ref[0]                                          # (1, N)
    if has_attn_mask:
        am = am_ref[0]                                             # (TQ, N)
        bias = am if bias is None else bias + am

    ohs = []
    for h in range(nhead):
        sl = slice(h * head_dim, (h + 1) * head_dim)
        # (TQ, D) x (D, N) plain MXU matmul — K already transposed in VMEM.
        s = jnp.dot(q_tile[:, sl], kT_s[sl, :],
                    preferred_element_type=jnp.float32)            # (TQ, N)
        if bias is not None:
            s = s + bias
        s = s - jnp.max(s, axis=-1, keepdims=True)                 # stable softmax
        p = jnp.exp(s)
        l = jnp.sum(p, axis=-1, keepdims=True)                     # (TQ, 1) >= 1
        oh = jnp.dot(p.astype(compute_dtype), v_s[:, sl],
                     preferred_element_type=jnp.float32)           # (TQ, D)
        # Normalize the small PV result, not the (TQ, N) probability tile.
        ohs.append(oh * pl.reciprocal(l, approx=approx_recip))
    # Gather heads in registers — no narrow-column VMEM stores / round-trip.
    attn = jnp.concatenate(ohs, axis=-1)                           # (TQ, C) f32

    # Single big output projection over all heads.
    out = jnp.dot(attn.astype(compute_dtype), wo_ref[...],
                  preferred_element_type=jnp.float32) + bo_ref[...]

    # dropout(p=0) is identity; residual read from the resident x block (f32).
    res = out + x_ref[0, pl.ds(q_start, tq), :]

    # LayerNorm over the channel dim (f32).
    mean = jnp.mean(res, axis=-1, keepdims=True)
    var = jnp.mean(jnp.square(res - mean), axis=-1, keepdims=True)
    normed = (res - mean) * jax.lax.rsqrt(var + ln_eps)
    out_ref[0] = (normed * gamma_ref[...] + beta_ref[...]).astype(out_ref.dtype)


# ------------------------------- Wrapper -------------------------------------
def _pick_q_tile(n, target=128):
    """Largest query-tile size <= target that divides n and is a multiple of 8
    (falls back to the whole sequence)."""
    if n <= target:
        return n
    for t in range(target, 7, -8):
        if n % t == 0:
            return t
    return n


def self_attention_layer(x, params, x_mask=None, attn_mask=None, pe=None, *,
                         nhead, matmul_dtype=jnp.bfloat16, ln_eps=1e-5,
                         q_tile_target=128,
                         vmem_limit_bytes=48 * 1024 * 1024):
    """x: (B, N, C) f32.  x_mask: (B, N) bool, True = key is padding (ignored).
    attn_mask: optional (B, N, N) additive float mask or bool (True = blocked),
    shared across heads (matches the module's per-head repeat).  pe: optional
    (B, N, C) positional embedding.

    Tuning: q_tile_target=256 and vmem_limit_bytes~96 MiB on v5e/v6e (128 MiB
    VMEM); keep 128 / <=48 MiB on v7x (64 MiB VMEM per TC)."""
    B, N, C = x.shape
    assert C % nhead == 0
    head_dim = C // nhead
    tq = _pick_q_tile(N, q_tile_target)
    assert N % tq == 0, "sequence length must be divisible by the query tile"
    n_q = N // tq

    has_pe = pe is not None
    has_kpm = x_mask is not None
    has_attn_mask = attn_mask is not None

    # Masks only carry {0, -1e9}: stream them in bf16 on the bf16 MXU path
    # (halves their DMA); keep f32 in the f32 validation path.
    mask_dtype = jnp.bfloat16 if matmul_dtype == jnp.bfloat16 else jnp.float32

    wq, wk, wv, bq, bk, bv, wo, bo, gamma, beta = params
    # Fused Q/K weight; weights cast to the MXU compute dtype (halves weight DMA
    # for bf16).  Biases / LN params stay f32, kept 2D for clean TPU layouts.
    wqk = jnp.concatenate([wq, wk], axis=1).astype(matmul_dtype)      # (C, 2C)
    bqk = jnp.concatenate([bq, bk]).reshape(1, 2 * C).astype(jnp.float32)
    wv_c = wv.astype(matmul_dtype)
    wo_c = wo.astype(matmul_dtype)
    bv2 = bv.reshape(1, C).astype(jnp.float32)
    bo2 = bo.reshape(1, C).astype(jnp.float32)
    gamma2 = gamma.reshape(1, C).astype(jnp.float32)
    beta2 = beta.reshape(1, C).astype(jnp.float32)

    # Exact reciprocal in the f32 validation path; EUP approx in production bf16.
    approx_recip = matmul_dtype != jnp.float32

    kernel = functools.partial(
        _self_attn_layer_kernel, nhead=nhead, head_dim=head_dim, tq=tq,
        ln_eps=ln_eps, has_pe=has_pe, has_kpm=has_kpm,
        has_attn_mask=has_attn_mask, compute_dtype=matmul_dtype,
        approx_recip=approx_recip)

    full_b = lambda b, qi: (b, 0, 0)      # whole-sequence block, per batch
    per_q = lambda b, qi: (b, qi, 0)      # per query tile
    const2 = lambda b, qi: (0, 0)         # constant weight block

    in_specs = [pl.BlockSpec((1, N, C), full_b)]   # x (full seq: proj + residual)
    inputs = [x]
    if has_pe:
        in_specs.append(pl.BlockSpec((1, N, C), full_b))
        inputs.append(pe)
    if has_kpm:
        kpm = jnp.where(x_mask, -1e9, 0.0).astype(mask_dtype).reshape(B, 1, N)
        in_specs.append(pl.BlockSpec((1, 1, N), full_b))
        inputs.append(kpm)
    if has_attn_mask:
        if attn_mask.dtype == jnp.bool_:
            attn_mask = jnp.where(attn_mask, -1e9, 0.0)
        attn_mask = attn_mask.astype(mask_dtype)
        assert attn_mask.shape == (B, N, N)
        in_specs.append(pl.BlockSpec((1, tq, N), per_q))
        inputs.append(attn_mask)
    in_specs += [
        pl.BlockSpec((C, 2 * C), const2),      # Wqk (fused)
        pl.BlockSpec((1, 2 * C), const2),      # bqk
        pl.BlockSpec((C, C), const2),          # Wv
        pl.BlockSpec((1, C), const2),          # bv
        pl.BlockSpec((C, C), const2),          # Wo
        pl.BlockSpec((1, C), const2),          # bo
        pl.BlockSpec((1, C), const2),          # gamma
        pl.BlockSpec((1, C), const2),          # beta
    ]
    inputs += [wqk, bqk, wv_c, bv2, wo_c, bo2, gamma2, beta2]

    return pl.pallas_call(
        kernel,
        out_shape=jax.ShapeDtypeStruct((B, N, C), x.dtype),
        grid_spec=pltpu.PrefetchScalarGridSpec(
            num_scalar_prefetch=0,
            grid=(B, n_q),
            in_specs=in_specs,
            out_specs=pl.BlockSpec((1, tq, C), per_q),
            scratch_shapes=[
                pltpu.VMEM((N, C), matmul_dtype),   # Q (pre-scaled), resident
                pltpu.VMEM((C, N), matmul_dtype),   # K^T, resident
                pltpu.VMEM((N, C), matmul_dtype),   # V, resident
            ],
        ),
        compiler_params=pltpu.CompilerParams(
            dimension_semantics=("parallel", "arbitrary"),
            vmem_limit_bytes=vmem_limit_bytes,
        ),
    )(*inputs)


# --------------------------- Pure-JAX reference -------------------------------
def _reference(x, params, x_mask, attn_mask, pe, nhead):
    wq, wk, wv, bq, bk, bv, wo, bo, gamma, beta = params
    B, N, C = x.shape
    D = C // nhead
    qk_in = x if pe is None else x + pe
    q = qk_in @ wq + bq
    k = qk_in @ wk + bk
    v = x @ wv + bv
    q = q.reshape(B, N, nhead, D).transpose(0, 2, 1, 3)
    k = k.reshape(B, N, nhead, D).transpose(0, 2, 1, 3)
    v = v.reshape(B, N, nhead, D).transpose(0, 2, 1, 3)
    s = jnp.einsum("bhqd,bhkd->bhqk", q, k) / jnp.sqrt(jnp.float32(D))
    if x_mask is not None:
        s = s + jnp.where(x_mask, -1e9, 0.0)[:, None, None, :]
    if attn_mask is not None:
        s = s + attn_mask[:, None, :, :]
    p = jax.nn.softmax(s, axis=-1)
    o = jnp.einsum("bhqk,bhkd->bhqd", p, v).transpose(0, 2, 1, 3).reshape(B, N, C)
    o = o @ wo + bo
    res = o + x
    mean = res.mean(-1, keepdims=True)
    var = ((res - mean) ** 2).mean(-1, keepdims=True)
    return (res - mean) * jax.lax.rsqrt(var + 1e-5) * gamma + beta


# --------------------------------- Main ---------------------------------------
if __name__ == "__main__":
    B, N, C, H = 2, 8, 32, 4   # batch, n_w, d_model, nhead

    key = jax.random.PRNGKey(0)
    keys = jax.random.split(key, 8)

    x = jax.random.normal(keys[0], (B, N, C), dtype=jnp.float32)
    pe = 0.1 * jax.random.normal(keys[1], (B, N, C), dtype=jnp.float32)
    # key_padding_mask: True = ignore. Mask the last two keys of batch 1.
    x_mask = jnp.zeros((B, N), dtype=bool).at[1, -2:].set(True)

    # Deterministic synthetic parameters (shapes from nn.MultiheadAttention /
    # nn.LayerNorm); weights stored in (C_in, C_out) math orientation.
    wq = 0.1 * jax.random.normal(keys[2], (C, C), dtype=jnp.float32)
    wk = 0.1 * jax.random.normal(keys[3], (C, C), dtype=jnp.float32)
    wv = 0.1 * jax.random.normal(keys[4], (C, C), dtype=jnp.float32)
    bq = 0.01 * jnp.arange(C, dtype=jnp.float32)
    bk = -0.01 * jnp.arange(C, dtype=jnp.float32)
    bv = 0.02 * jnp.ones((C,), dtype=jnp.float32)
    wo = 0.1 * jax.random.normal(keys[5], (C, C), dtype=jnp.float32)
    bo = 0.03 * jnp.ones((C,), dtype=jnp.float32)
    gamma = jnp.ones((C,), dtype=jnp.float32)
    beta = jnp.zeros((C,), dtype=jnp.float32)
    params = (wq, wk, wv, bq, bk, bv, wo, bo, gamma, beta)

    ref = _reference(x, params, x_mask, None, pe, H)

    # 1) f32 MXU path — tight structural check.
    out32 = self_attention_layer(x, params, x_mask=x_mask, pe=pe, nhead=H,
                                 matmul_dtype=jnp.float32)
    out32 = jax.block_until_ready(out32)
    assert out32.shape == (B, N, C)
    err32 = jnp.max(jnp.abs(out32 - ref))
    assert jnp.allclose(out32, ref, atol=2e-3, rtol=2e-3), f"f32 max err {err32}"

    # 2) bf16 MXU path (production config for v6e/v7x) — bf16-level tolerance.
    outbf = self_attention_layer(x, params, x_mask=x_mask, pe=pe, nhead=H,
                                 matmul_dtype=jnp.bfloat16)
    outbf = jax.block_until_ready(outbf)
    errbf = jnp.max(jnp.abs(outbf - ref))
    assert jnp.allclose(outbf, ref, atol=5e-2, rtol=5e-2), f"bf16 max err {errbf}"

    # 3) explicit attn_mask path (additive float mask, shared across heads).
    am = jnp.where(jax.random.uniform(keys[6], (B, N, N)) < 0.25,
                   jnp.float32(-1e9), jnp.float32(0.0))
    out_am = self_attention_layer(x, params, x_mask=x_mask, attn_mask=am, pe=pe,
                                  nhead=H, matmul_dtype=jnp.float32)
    out_am = jax.block_until_ready(out_am)
    ref_am = _reference(x, params, x_mask, am, pe, H)
    err_am = jnp.max(jnp.abs(out_am - ref_am))
    assert jnp.allclose(out_am, ref_am, atol=2e-3, rtol=2e-3), (
        f"attn_mask max err {err_am}")

    # 4) specialized fast path: pe=None, x_mask=None (no zero tensors streamed).
    out_np = self_attention_layer(x, params, nhead=H, matmul_dtype=jnp.float32)
    out_np = jax.block_until_ready(out_np)
    ref_np = _reference(x, params, None, None, None, H)
    err_np = jnp.max(jnp.abs(out_np - ref_np))
    assert jnp.allclose(out_np, ref_np, atol=2e-3, rtol=2e-3), (
        f"no-pe/no-mask max err {err_np}")

    print("KERNEL_OK")
</pallas_src>

<mosaic_0001>
module attributes {stable_mosaic.version = 11 : i64} {
  func.func @_self_attn_layer_kernel(%arg0: i32, %arg1: i32, %arg2: memref<1x8x32xf32, #tpu.memory_space<vmem>>, %arg3: memref<1x8x32xf32, #tpu.memory_space<vmem>>, %arg4: memref<1x1x8xf32, #tpu.memory_space<vmem>>, %arg5: memref<32x64xf32, #tpu.memory_space<vmem>>, %arg6: memref<1x64xf32, #tpu.memory_space<vmem>>, %arg7: memref<32x32xf32, #tpu.memory_space<vmem>>, %arg8: memref<1x32xf32, #tpu.memory_space<vmem>>, %arg9: memref<32x32xf32, #tpu.memory_space<vmem>>, %arg10: memref<1x32xf32, #tpu.memory_space<vmem>>, %arg11: memref<1x32xf32, #tpu.memory_space<vmem>>, %arg12: memref<1x32xf32, #tpu.memory_space<vmem>>, %arg13: memref<1x8x32xf32, #tpu.memory_space<vmem>>, %arg14: memref<8x32xf32, #tpu.memory_space<vmem>>, %arg15: memref<32x8xf32, #tpu.memory_space<vmem>>, %arg16: memref<8x32xf32, #tpu.memory_space<vmem>>) attributes {dimension_semantics = [#tpu.dimension_semantics<parallel>, #tpu.dimension_semantics<arbitrary>], iteration_bounds = array<i64: 2, 1>, scalar_prefetch = 0 : i64, scratch_operands = 3 : i64, tpu.core_type = #tpu.core_type<tc>, window_params = [{transform_indices = @transform_0, window_bounds = array<i64: 1, 8, 32>}, {transform_indices = @transform_1, window_bounds = array<i64: 1, 8, 32>}, {transform_indices = @transform_2, window_bounds = array<i64: 1, 1, 8>}, {pipeline_mode = #tpu.pipeline_mode<synchronous>, transform_indices = @transform_3, window_bounds = array<i64: 32, 64>}, {pipeline_mode = #tpu.pipeline_mode<synchronous>, transform_indices = @transform_4, window_bounds = array<i64: 1, 64>}, {pipeline_mode = #tpu.pipeline_mode<synchronous>, transform_indices = @transform_5, window_bounds = array<i64: 32, 32>}, {pipeline_mode = #tpu.pipeline_mode<synchronous>, transform_indices = @transform_6, window_bounds = array<i64: 1, 32>}, {pipeline_mode = #tpu.pipeline_mode<synchronous>, transform_indices = @transform_7, window_bounds = array<i64: 32, 32>}, {pipeline_mode = #tpu.pipeline_mode<synchronous>, transform_indices = @transform_8, window_bounds = array<i64: 1, 32>}, {pipeline_mode = #tpu.pipeline_mode<synchronous>, transform_indices = @transform_9, window_bounds = array<i64: 1, 32>}, {pipeline_mode = #tpu.pipeline_mode<synchronous>, transform_indices = @transform_10, window_bounds = array<i64: 1, 32>}, {transform_indices = @transform_11, window_bounds = array<i64: 1, 8, 32>}]} {
    %cst = arith.constant 8.000000e+00 : f32
    %0 = math.sqrt %cst : f32
    %cst_0 = arith.constant 1.000000e+00 : f32
    %1 = arith.divf %cst_0, %0 : f32
    %c0_i32 = arith.constant 0 : i32
    %2 = arith.cmpi eq, %arg1, %c0_i32 : i32
    %3 = arith.extui %2 : i1 to i32
    %c0_i32_1 = arith.constant 0 : i32
    %4 = arith.cmpi ne, %3, %c0_i32_1 : i32
    scf.if %4 {
      %c0_53 = arith.constant 0 : index
      %c0_54 = arith.constant 0 : index
      %c0_55 = arith.constant 0 : index
      %116 = vector.load %arg2[%c0_53, %c0_54, %c0_55] : memref<1x8x32xf32, #tpu.memory_space<vmem>>, vector<1x8x32xf32>
      %117 = vector.shape_cast %116 : vector<1x8x32xf32> to vector<8x32xf32>
      %c0_56 = arith.constant 0 : index
      %c0_57 = arith.constant 0 : index
      %c0_58 = arith.constant 0 : index
      %118 = vector.load %arg3[%c0_56, %c0_57, %c0_58] : memref<1x8x32xf32, #tpu.memory_space<vmem>>, vector<1x8x32xf32>
      %119 = vector.shape_cast %118 : vector<1x8x32xf32> to vector<8x32xf32>
      %120 = arith.addf %117, %119 : vector<8x32xf32>
      %c0_59 = arith.constant 0 : index
      %c0_60 = arith.constant 0 : index
      %121 = vector.load %arg5[%c0_59, %c0_60] : memref<32x64xf32, #tpu.memory_space<vmem>>, vector<32x64xf32>
      %cst_61 = arith.constant dense<0.000000e+00> : vector<8x64xf32>
      %122 = tpu.matmul %120, %121, %cst_61 {dimension_numbers = #tpu.dot_dimension_numbers<[1], [0], [0], [1], [0, 0, 1, 1], [], []>} : vector<8x32xf32>, vector<32x64xf32>, vector<8x64xf32> -> vector<8x64xf32>
      %c0_62 = arith.constant 0 : index
      %c0_63 = arith.constant 0 : index
      %123 = vector.load %arg6[%c0_62, %c0_63] : memref<1x64xf32, #tpu.memory_space<vmem>>, vector<1x64xf32>
      %124 = vector.broadcast %123 : vector<1x64xf32> to vector<8x64xf32>
      %125 = arith.addf %122, %124 : vector<8x64xf32>
      %126 = vector.extract_strided_slice %125 {offsets = [0, 0], sizes = [8, 32], strides = [1, 1]} : vector<8x64xf32> to vector<8x32xf32>
      %127 = vector.broadcast %1 : f32 to vector<8x32xf32>
      %128 = arith.mulf %126, %127 : vector<8x32xf32>
      %c0_64 = arith.constant 0 : index
      %c0_65 = arith.constant 0 : index
      %129 = vector.load %arg14[%c0_64, %c0_65] : memref<8x32xf32, #tpu.memory_space<vmem>>, vector<8x32xf32>
      tpu.vector_store %arg14[%c0_64, %c0_65], %128 {strides = array<i32>} : memref<8x32xf32, #tpu.memory_space<vmem>>, vector<8x32xf32>,
      %130 = vector.extract_strided_slice %125 {offsets = [0, 32], sizes = [8, 32], strides = [1, 1]} : vector<8x64xf32> to vector<8x32xf32>
      %131 = tpu.transpose %130, [1, 0] : vector<8x32xf32> -> vector<32x8xf32>
      %c0_66 = arith.constant 0 : index
      %c0_67 = arith.constant 0 : index
      %132 = vector.load %arg15[%c0_66, %c0_67] : memref<32x8xf32, #tpu.memory_space<vmem>>, vector<32x8xf32>
      tpu.vector_store %arg15[%c0_66, %c0_67], %131 {strides = array<i32>} : memref<32x8xf32, #tpu.memory_space<vmem>>, vector<32x8xf32>,
      %c0_68 = arith.constant 0 : index
      %c0_69 = arith.constant 0 : index
      %133 = vector.load %arg7[%c0_68, %c0_69] : memref<32x32xf32, #tpu.memory_space<vmem>>, vector<32x32xf32>
      %cst_70 = arith.constant dense<0.000000e+00> : vector<8x32xf32>
      %134 = tpu.matmul %117, %133, %cst_70 {dimension_numbers = #tpu.dot_dimension_numbers<[1], [0], [0], [1], [0, 0, 1, 1], [], []>} : vector<8x32xf32>, vector<32x32xf32>, vector<8x32xf32> -> vector<8x32xf32>
      %c0_71 = arith.constant 0 : index
      %c0_72 = arith.constant 0 : index
      %135 = vector.load %arg8[%c0_71, %c0_72] : memref<1x32xf32, #tpu.memory_space<vmem>>, vector<1x32xf32>
      %136 = vector.broadcast %135 : vector<1x32xf32> to vector<8x32xf32>
      %137 = arith.addf %134, %136 : vector<8x32xf32>
      %c0_73 = arith.constant 0 : index
      %c0_74 = arith.constant 0 : index
      %138 = vector.load %arg16[%c0_73, %c0_74] : memref<8x32xf32, #tpu.memory_space<vmem>>, vector<8x32xf32>
      tpu.vector_store %arg16[%c0_73, %c0_74], %137 {strides = array<i32>} : memref<8x32xf32, #tpu.memory_space<vmem>>, vector<8x32xf32>,
    } else {
    }
    %c8_i32 = arith.constant 8 : i32
    %5 = arith.muli %arg1, %c8_i32 : i32
    %6 = tpu.assume_multiple %5, 8 : i32
    %7 = arith.index_cast %6 : i32 to index
    %c0 = arith.constant 0 : index
    %8 = vector.load %arg14[%7, %c0] : memref<8x32xf32, #tpu.memory_space<vmem>>, vector<8x32xf32>
    %c0_2 = arith.constant 0 : index
    %c0_3 = arith.constant 0 : index
    %c0_4 = arith.constant 0 : index
    %9 = vector.load %arg4[%c0_2, %c0_3, %c0_4] : memref<1x1x8xf32, #tpu.memory_space<vmem>>, vector<1x1x8xf32>
    %10 = vector.shape_cast %9 : vector<1x1x8xf32> to vector<1x8xf32>
    %11 = vector.extract_strided_slice %8 {offsets = [0, 0], sizes = [8, 8], strides = [1, 1]} : vector<8x32xf32> to vector<8x8xf32>
    %c0_5 = arith.constant 0 : index
    %c0_6 = arith.constant 0 : index
    %12 = vector.load %arg15[%c0_5, %c0_6] : memref<32x8xf32, #tpu.memory_space<vmem>>, vector<8x8xf32>
    %cst_7 = arith.constant dense<0.000000e+00> : vector<8x8xf32>
    %13 = tpu.matmul %11, %12, %cst_7 {dimension_numbers = #tpu.dot_dimension_numbers<[1], [0], [0], [1], [0, 0, 1, 1], [], []>} : vector<8x8xf32>, vector<8x8xf32>, vector<8x8xf32> -> vector<8x8xf32>
    %14 = vector.broadcast %10 : vector<1x8xf32> to vector<8x8xf32>
    %15 = arith.addf %13, %14 : vector<8x8xf32>
    %cst_8 = arith.constant dense<0xFF800000> : vector<8xf32>
    %16 = vector.multi_reduction <maximumf>, %15, %cst_8 [1] : vector<8x8xf32> to vector<8xf32>
    %17 = vector.shape_cast %16 : vector<8xf32> to vector<8x1xf32>
    %18 = vector.broadcast %17 : vector<8x1xf32> to vector<8x8xf32>
    %19 = arith.subf %15, %18 : vector<8x8xf32>
    %20 = math.exp %19 : vector<8x8xf32>
    %cst_9 = arith.constant dense<0.000000e+00> : vector<8xf32>
    %21 = vector.multi_reduction <add>, %20, %cst_9 [1] : vector<8x8xf32> to vector<8xf32>
    %22 = vector.shape_cast %21 : vector<8xf32> to vector<8x1xf32>
    %c0_10 = arith.constant 0 : index
    %c0_11 = arith.constant 0 : index
    %23 = vector.load %arg16[%c0_10, %c0_11] : memref<8x32xf32, #tpu.memory_space<vmem>>, vector<8x8xf32>
    %cst_12 = arith.constant dense<0.000000e+00> : vector<8x8xf32>
    %24 = tpu.matmul %20, %23, %cst_12 {dimension_numbers = #tpu.dot_dimension_numbers<[1], [0], [0], [1], [0, 0, 1, 1], [], []>} : vector<8x8xf32>, vector<8x8xf32>, vector<8x8xf32> -> vector<8x8xf32>
    %25 = tpu.reciprocal %22 : vector<8x1xf32> -> vector<8x1xf32>
    %26 = vector.broadcast %25 : vector<8x1xf32> to vector<8x8xf32>
    %27 = arith.mulf %24, %26 : vector<8x8xf32>
    %28 = vector.extract_strided_slice %8 {offsets = [0, 8], sizes = [8, 8], strides = [1, 1]} : vector<8x32xf32> to vector<8x8xf32>
    %c8 = arith.constant 8 : index
    %c0_13 = arith.constant 0 : index
    %29 = vector.load %arg15[%c8, %c0_13] : memref<32x8xf32, #tpu.memory_space<vmem>>, vector<8x8xf32>
    %cst_14 = arith.constant dense<0.000000e+00> : vector<8x8xf32>
    %30 = tpu.matmul %28, %29, %cst_14 {dimension_numbers = #tpu.dot_dimension_numbers<[1], [0], [0], [1], [0, 0, 1, 1], [], []>} : vector<8x8xf32>, vector<8x8xf32>, vector<8x8xf32> -> vector<8x8xf32>
    %31 = vector.broadcast %10 : vector<1x8xf32> to vector<8x8xf32>
    %32 = arith.addf %30, %31 : vector<8x8xf32>
    %cst_15 = arith.constant dense<0xFF800000> : vector<8xf32>
    %33 = vector.multi_reduction <maximumf>, %32, %cst_15 [1] : vector<8x8xf32> to vector<8xf32>
    %34 = vector.shape_cast %33 : vector<8xf32> to vector<8x1xf32>
    %35 = vector.broadcast %34 : vector<8x1xf32> to vector<8x8xf32>
    %36 = arith.subf %32, %35 : vector<8x8xf32>
    %37 = math.exp %36 : vector<8x8xf32>
    %cst_16 = arith.constant dense<0.000000e+00> : vector<8xf32>
    %38 = vector.multi_reduction <add>, %37, %cst_16 [1] : vector<8x8xf32> to vector<8xf32>
    %39 = vector.shape_cast %38 : vector<8xf32> to vector<8x1xf32>
    %c0_17 = arith.constant 0 : index
    %c8_18 = arith.constant 8 : index
    %40 = vector.load %arg16[%c0_17, %c8_18] : memref<8x32xf32, #tpu.memory_space<vmem>>, vector<8x8xf32>
    %cst_19 = arith.constant dense<0.000000e+00> : vector<8x8xf32>
    %41 = tpu.matmul %37, %40, %cst_19 {dimension_numbers = #tpu.dot_dimension_numbers<[1], [0], [0], [1], [0, 0, 1, 1], [], []>} : vector<8x8xf32>, vector<8x8xf32>, vector<8x8xf32> -> vector<8x8xf32>
    %42 = tpu.reciprocal %39 : vector<8x1xf32> -> vector<8x1xf32>
    %43 = vector.broadcast %42 : vector<8x1xf32> to vector<8x8xf32>
    %44 = arith.mulf %41, %43 : vector<8x8xf32>
    %45 = vector.extract_strided_slice %8 {offsets = [0, 16], sizes = [8, 8], strides = [1, 1]} : vector<8x32xf32> to vector<8x8xf32>
    %c16 = arith.constant 16 : index
    %c0_20 = arith.constant 0 : index
    %46 = vector.load %arg15[%c16, %c0_20] : memref<32x8xf32, #tpu.memory_space<vmem>>, vector<8x8xf32>
    %cst_21 = arith.constant dense<0.000000e+00> : vector<8x8xf32>
    %47 = tpu.matmul %45, %46, %cst_21 {dimension_numbers = #tpu.dot_dimension_numbers<[1], [0], [0], [1], [0, 0, 1, 1], [], []>} : vector<8x8xf32>, vector<8x8xf32>, vector<8x8xf32> -> vector<8x8xf32>
    %48 = vector.broadcast %10 : vector<1x8xf32> to vector<8x8xf32>
    %49 = arith.addf %47, %48 : vector<8x8xf32>
    %cst_22 = arith.constant dense<0xFF800000> : vector<8xf32>
    %50 = vector.multi_reduction <maximumf>, %49, %cst_22 [1] : vector<8x8xf32> to vector<8xf32>
    %51 = vector.shape_cast %50 : vector<8xf32> to vector<8x1xf32>
    %52 = vector.broadcast %51 : vector<8x1xf32> to vector<8x8xf32>
    %53 = arith.subf %49, %52 : vector<8x8xf32>
    %54 = math.exp %53 : vector<8x8xf32>
    %cst_23 = arith.constant dense<0.000000e+00> : vector<8xf32>
    %55 = vector.multi_reduction <add>, %54, %cst_23 [1] : vector<8x8xf32> to vector<8xf32>
    %56 = vector.shape_cast %55 : vector<8xf32> to vector<8x1xf32>
    %c0_24 = arith.constant 0 : index
    %c16_25 = arith.constant 16 : index
    %57 = vector.load %arg16[%c0_24, %c16_25] : memref<8x32xf32, #tpu.memory_space<vmem>>, vector<8x8xf32>
    %cst_26 = arith.constant dense<0.000000e+00> : vector<8x8xf32>
    %58 = tpu.matmul %54, %57, %cst_26 {dimension_numbers = #tpu.dot_dimension_numbers<[1], [0], [0], [1], [0, 0, 1, 1], [], []>} : vector<8x8xf32>, vector<8x8xf32>, vector<8x8xf32> -> vector<8x8xf32>
    %59 = tpu.reciprocal %56 : vector<8x1xf32> -> vector<8x1xf32>
    %60 = vector.broadcast %59 : vector<8x1xf32> to vector<8x8xf32>
    %61 = arith.mulf %58, %60 : vector<8x8xf32>
    %62 = vector.extract_strided_slice %8 {offsets = [0, 24], sizes = [8, 8], strides = [1, 1]} : vector<8x32xf32> to vector<8x8xf32>
    %c24 = arith.constant 24 : index
    %c0_27 = arith.constant 0 : index
    %63 = vector.load %arg15[%c24, %c0_27] : memref<32x8xf32, #tpu.memory_space<vmem>>, vector<8x8xf32>
    %cst_28 = arith.constant dense<0.000000e+00> : vector<8x8xf32>
    %64 = tpu.matmul %62, %63, %cst_28 {dimension_numbers = #tpu.dot_dimension_numbers<[1], [0], [0], [1], [0, 0, 1, 1], [], []>} : vector<8x8xf32>, vector<8x8xf32>, vector<8x8xf32> -> vector<8x8xf32>
    %65 = vector.broadcast %10 : vector<1x8xf32> to vector<8x8xf32>
    %66 = arith.addf %64, %65 : vector<8x8xf32>
    %cst_29 = arith.constant dense<0xFF800000> : vector<8xf32>
    %67 = vector.multi_reduction <maximumf>, %66, %cst_29 [1] : vector<8x8xf32> to vector<8xf32>
    %68 = vector.shape_cast %67 : vector<8xf32> to vector<8x1xf32>
    %69 = vector.broadcast %68 : vector<8x1xf32> to vector<8x8xf32>
    %70 = arith.subf %66, %69 : vector<8x8xf32>
    %71 = math.exp %70 : vector<8x8xf32>
    %cst_30 = arith.constant dense<0.000000e+00> : vector<8xf32>
    %72 = vector.multi_reduction <add>, %71, %cst_30 [1] : vector<8x8xf32> to vector<8xf32>
    %73 = vector.shape_cast %72 : vector<8xf32> to vector<8x1xf32>
    %c0_31 = arith.constant 0 : index
    %c24_32 = arith.constant 24 : index
    %74 = vector.load %arg16[%c0_31, %c24_32] : memref<8x32xf32, #tpu.memory_space<vmem>>, vector<8x8xf32>
    %cst_33 = arith.constant dense<0.000000e+00> : vector<8x8xf32>
    %75 = tpu.matmul %71, %74, %cst_33 {dimension_numbers = #tpu.dot_dimension_numbers<[1], [0], [0], [1], [0, 0, 1, 1], [], []>} : vector<8x8xf32>, vector<8x8xf32>, vector<8x8xf32> -> vector<8x8xf32>
    %76 = tpu.reciprocal %73 : vector<8x1xf32> -> vector<8x1xf32>
    %77 = vector.broadcast %76 : vector<8x1xf32> to vector<8x8xf32>
    %78 = arith.mulf %75, %77 : vector<8x8xf32>
    %79 = tpu.concatenate %27, %44, %61, %78 in 1 : vector<8x8xf32>, vector<8x8xf32>, vector<8x8xf32>, vector<8x8xf32> -> vector<8x32xf32>
    %c0_34 = arith.constant 0 : index
    %c0_35 = arith.constant 0 : index
    %80 = vector.load %arg9[%c0_34, %c0_35] : memref<32x32xf32, #tpu.memory_space<vmem>>, vector<32x32xf32>
    %cst_36 = arith.constant dense<0.000000e+00> : vector<8x32xf32>
    %81 = tpu.matmul %79, %80, %cst_36 {dimension_numbers = #tpu.dot_dimension_numbers<[1], [0], [0], [1], [0, 0, 1, 1], [], []>} : vector<8x32xf32>, vector<32x32xf32>, vector<8x32xf32> -> vector<8x32xf32>
    %c0_37 = arith.constant 0 : index
    %c0_38 = arith.constant 0 : index
    %82 = vector.load %arg10[%c0_37, %c0_38] : memref<1x32xf32, #tpu.memory_space<vmem>>, vector<1x32xf32>
    %83 = vector.broadcast %82 : vector<1x32xf32> to vector<8x32xf32>
    %84 = arith.addf %81, %83 : vector<8x32xf32>
    %c0_39 = arith.constant 0 : index
    %85 = arith.index_cast %6 : i32 to index
    %c0_40 = arith.constant 0 : index
    %86 = vector.load %arg2[%c0_39, %85, %c0_40] : memref<1x8x32xf32, #tpu.memory_space<vmem>>, vector<1x8x32xf32>
    %87 = vector.shape_cast %86 : vector<1x8x32xf32> to vector<8x32xf32>
    %88 = arith.addf %84, %87 : vector<8x32xf32>
    %cst_41 = arith.constant dense<0.000000e+00> : vector<8xf32>
    %89 = vector.multi_reduction <add>, %88, %cst_41 [1] : vector<8x32xf32> to vector<8xf32>
    %90 = vector.shape_cast %89 : vector<8xf32> to vector<8x1xf32>
    %cst_42 = arith.constant 3.200000e+01 : f32
    %91 = vector.broadcast %cst_42 : f32 to vector<8x1xf32>
    %92 = arith.divf %90, %91 : vector<8x1xf32>
    %93 = vector.broadcast %92 : vector<8x1xf32> to vector<8x32xf32>
    %94 = arith.subf %88, %93 : vector<8x32xf32>
    %95 = arith.mulf %94, %94 : vector<8x32xf32>
    %cst_43 = arith.constant dense<0.000000e+00> : vector<8xf32>
    %96 = vector.multi_reduction <add>, %95, %cst_43 [1] : vector<8x32xf32> to vector<8xf32>
    %97 = vector.shape_cast %96 : vector<8xf32> to vector<8x1xf32>
    %cst_44 = arith.constant 3.200000e+01 : f32
    %98 = vector.broadcast %cst_44 : f32 to vector<8x1xf32>
    %99 = arith.divf %97, %98 : vector<8x1xf32>
    %100 = vector.broadcast %92 : vector<8x1xf32> to vector<8x32xf32>
    %101 = arith.subf %88, %100 : vector<8x32xf32>
    %cst_45 = arith.constant 9.99999974E-6 : f32
    %102 = vector.broadcast %cst_45 : f32 to vector<8x1xf32>
    %103 = arith.addf %99, %102 : vector<8x1xf32>
    %104 = math.rsqrt %103 : vector<8x1xf32>
    %105 = vector.broadcast %104 : vector<8x1xf32> to vector<8x32xf32>
    %106 = arith.mulf %101, %105 : vector<8x32xf32>
    %c0_46 = arith.constant 0 : index
    %c0_47 = arith.constant 0 : index
    %107 = vector.load %arg11[%c0_46, %c0_47] : memref<1x32xf32, #tpu.memory_space<vmem>>, vector<1x32xf32>
    %108 = vector.broadcast %107 : vector<1x32xf32> to vector<8x32xf32>
    %109 = arith.mulf %106, %108 : vector<8x32xf32>
    %c0_48 = arith.constant 0 : index
    %c0_49 = arith.constant 0 : index
    %110 = vector.load %arg12[%c0_48, %c0_49] : memref<1x32xf32, #tpu.memory_space<vmem>>, vector<1x32xf32>
    %111 = vector.broadcast %110 : vector<1x32xf32> to vector<8x32xf32>
    %112 = arith.addf %109, %111 : vector<8x32xf32>
    %c0_50 = arith.constant 0 : index
    %c0_51 = arith.constant 0 : index
    %c0_52 = arith.constant 0 : index
    %113 = vector.load %arg13[%c0_50, %c0_51, %c0_52] : memref<1x8x32xf32, #tpu.memory_space<vmem>>, vector<1x8x32xf32>
    %114 = vector.shape_cast %113 : vector<1x8x32xf32> to vector<8x32xf32>
    %115 = vector.shape_cast %112 : vector<8x32xf32> to vector<1x8x32xf32>
    tpu.vector_store %arg13[%c0_50, %c0_51, %c0_52], %115 {strides = array<i32>} : memref<1x8x32xf32, #tpu.memory_space<vmem>>, vector<1x8x32xf32>,
    return
  }
  func.func @transform_0(%arg0: i32, %arg1: i32) -> (i32, i32, i32) {
    %c0_i32 = arith.constant 0 : i32
    %c0_i32_0 = arith.constant 0 : i32
    %c0_i32_1 = arith.constant 0 : i32
    return %arg0, %c0_i32, %c0_i32_0 : i32, i32, i32
  }
  func.func @transform_1(%arg0: i32, %arg1: i32) -> (i32, i32, i32) {
    %c0_i32 = arith.constant 0 : i32
    %c0_i32_0 = arith.constant 0 : i32
    %c0_i32_1 = arith.constant 0 : i32
    return %arg0, %c0_i32, %c0_i32_0 : i32, i32, i32
  }
  func.func @transform_2(%arg0: i32, %arg1: i32) -> (i32, i32, i32) {
    %c0_i32 = arith.constant 0 : i32
    %c0_i32_0 = arith.constant 0 : i32
    %c0_i32_1 = arith.constant 0 : i32
    return %arg0, %c0_i32, %c0_i32_0 : i32, i32, i32
  }
  func.func @transform_3(%arg0: i32, %arg1: i32) -> (i32, i32) {
    %c0_i32 = arith.constant 0 : i32
    %c0_i32_0 = arith.constant 0 : i32
    %c0_i32_1 = arith.constant 0 : i32
    return %c0_i32, %c0_i32_0 : i32, i32
  }
  func.func @transform_4(%arg0: i32, %arg1: i32) -> (i32, i32) {
    %c0_i32 = arith.constant 0 : i32
    %c0_i32_0 = arith.constant 0 : i32
    %c0_i32_1 = arith.constant 0 : i32
    return %c0_i32, %c0_i32_0 : i32, i32
  }
  func.func @transform_5(%arg0: i32, %arg1: i32) -> (i32, i32) {
    %c0_i32 = arith.constant 0 : i32
    %c0_i32_0 = arith.constant 0 : i32
    %c0_i32_1 = arith.constant 0 : i32
    return %c0_i32, %c0_i32_0 : i32, i32
  }
  func.func @transform_6(%arg0: i32, %arg1: i32) -> (i32, i32) {
    %c0_i32 = arith.constant 0 : i32
    %c0_i32_0 = arith.constant 0 : i32
    %c0_i32_1 = arith.constant 0 : i32
    return %c0_i32, %c0_i32_0 : i32, i32
  }
  func.func @transform_7(%arg0: i32, %arg1: i32) -> (i32, i32) {
    %c0_i32 = arith.constant 0 : i32
    %c0_i32_0 = arith.constant 0 : i32
    %c0_i32_1 = arith.constant 0 : i32
    return %c0_i32, %c0_i32_0 : i32, i32
  }
  func.func @transform_8(%arg0: i32, %arg1: i32) -> (i32, i32) {
    %c0_i32 = arith.constant 0 : i32
    %c0_i32_0 = arith.constant 0 : i32
    %c0_i32_1 = arith.constant 0 : i32
    return %c0_i32, %c0_i32_0 : i32, i32
  }
  func.func @transform_9(%arg0: i32, %arg1: i32) -> (i32, i32) {
    %c0_i32 = arith.constant 0 : i32
    %c0_i32_0 = arith.constant 0 : i32
    %c0_i32_1 = arith.constant 0 : i32
    return %c0_i32, %c0_i32_0 : i32, i32
  }
  func.func @transform_10(%arg0: i32, %arg1: i32) -> (i32, i32) {
    %c0_i32 = arith.constant 0 : i32
    %c0_i32_0 = arith.constant 0 : i32
    %c0_i32_1 = arith.constant 0 : i32
    return %c0_i32, %c0_i32_0 : i32, i32
  }
  func.func @transform_11(%arg0: i32, %arg1: i32) -> (i32, i32, i32) {
    %c0_i32 = arith.constant 0 : i32
    %c0_i32_0 = arith.constant 0 : i32
    return %arg0, %arg1, %c0_i32 : i32, i32, i32
  }
}

</mosaic_0001>

<llo_original>
// kernel: tpu_custom_call.1
$region0: #{tpu_custom_call.1}
  #allocation0 [shape = 'u32[]', space=smem, size = 0x4, offset = 0x4, fixed_abs, tag = 'smem constant byte address 0x4 - core index']
  #allocation1 [shape = 'u32[144,128]{1,0:T(1,128)}', space=vmem, size = 0x12000, scoped, tag = 'internal scratch']
  #allocation2 [shape = 'f32[8,32]{1,0:T(8,128)}', space=vmem, size = 0x1000, scoped, tag = 'scratch operand']
  #allocation3 [shape = 'f32[32,8]{1,0:T(8,128)}', space=vmem, size = 0x4000, scoped, tag = 'scratch operand']
  #allocation4 [shape = 'f32[8,32]{1,0:T(8,128)}', space=vmem, size = 0x1000, scoped, tag = 'scratch operand']
  %s0 = inlined_call_operand.hbm [shape: f32[2,8,32], index: 0, kind: input, shape index: {}]
  %s1 = inlined_call_operand.hbm [shape: f32[2,8,32], index: 1, kind: input, shape index: {}]
  %s2 = inlined_call_operand.vmem [shape: f32[2,1,8], index: 2, kind: input, shape index: {}]
  %s3 = inlined_call_operand.hbm [shape: f32[32,64], index: 3, kind: input, shape index: {}]
  %s4 = inlined_call_operand.vmem [shape: f32[1,64], index: 4, kind: input, shape index: {}]
  %s5 = inlined_call_operand.hbm [shape: f32[32,32], index: 5, kind: input, shape index: {}]
  %s6 = inlined_call_operand.vmem [shape: f32[1,32], index: 6, kind: input, shape index: {}]
  %s7 = inlined_call_operand.hbm [shape: f32[32,32], index: 7, kind: input, shape index: {}]
  %s8 = inlined_call_operand.vmem [shape: f32[1,32], index: 8, kind: input, shape index: {}]
  %s9 = inlined_call_operand.vmem [shape: f32[1,32], index: 9, kind: input, shape index: {}]
  %s10 = inlined_call_operand.vmem [shape: f32[1,32], index: 10, kind: input, shape index: {}]
  %s11 = inlined_call_operand.hbm [shape: f32[2,8,32], index: 11, kind: output, shape index: {}]
  %s12 = sld [smem:[#allocation0]]
  $region101: #{tpu_custom_call.1} parent=0
    _
  %s14 = ssub.s32 1, %s12
  %s15 = scalar_select 0, %s14, %s12
  $region1: #{tpu_custom_call.1} parent=0
    #allocation5 [shape = 'u8[8192]{0}', space=vmem, size = 0x2000, scoped, tag = 'input window, operand 0']
    #allocation6 [shape = 's32[2]{0}', space=sflag, size = 0x8, scoped, tag = 'scoped memory for tpu_custom_call.1']
    #allocation7 [shape = 's32[2]{0}', space=sflag, size = 0x8, scoped, tag = 'scoped memory for tpu_custom_call.1']
    #allocation8 [shape = 'u8[8192]{0}', space=vmem, size = 0x2000, scoped, tag = 'input window, operand 1']
    #allocation9 [shape = 's32[2]{0}', space=sflag, size = 0x8, scoped, tag = 'scoped memory for tpu_custom_call.1']
    #allocation10 [shape = 'u8[16384]{0}', space=vmem, size = 0x4000, scoped, tag = 'input window, operand 3, single buffered']
    #allocation11 [shape = 'u8[16384]{0}', space=vmem, size = 0x4000, scoped, tag = 'input window, operand 5, single buffered']
    #allocation12 [shape = 's32[1]{0}', space=sflag, size = 0x4, scoped, tag = 'scoped memory for tpu_custom_call.1']
    #allocation13 [shape = 'u8[16384]{0}', space=vmem, size = 0x4000, scoped, tag = 'input window, operand 7, single buffered']
    #allocation14 [shape = 'u8[8192]{0}', space=vmem, size = 0x2000, scoped, tag = 'output window, operand 0']
    %16 = vsyncpa [#allocation6], 0
    %s17 = scalar_lea.sflag [#allocation6], 1
    %18 = vsyncpa %s17, 0
    %19 = vsyncpa [#allocation9], 0
    %s20 = scalar_lea.sflag [#allocation9], 1
    %21 = vsyncpa %s20, 0
    %22 = vsyncpa [#allocation12], 0
    %23 = vsyncpa [#allocation7], 0
    %s24 = scalar_lea.sflag [#allocation7], 1
    %25 = vsyncpa %s24, 0
    loop: start=0, step=1, limit=4
    $region2: #{tpu_custom_call.1} parent=1 // loop_pre_header
      _
    $region3: #{tpu_custom_call.1} parent=1 // loop_header
      %s27 = sphi 0, %s31
      %p28 = scmp.ge.s32.totalorder %s27, 4
      %s34 = sphi 0, %s46
      %s35 = sphi 0, %s42
      %s36 = sphi 0, %s34
      %s37 = sphi 0, %s35
      %s38 = sphi 0, %s36
      %s39 = sphi 0, %s37
      %s49 = sphi 0, %s51
      %s52 = sphi 0, %s49
      %s53 = sphi 0, %s52
      %s69 = sphi 0, %s53
      %s75 = sphi 0, %s77
      %s78 = sphi 0, %s75
      %s79 = sphi 0, %s78
      %s95 = sphi 0, %s79
      %s101 = sphi 0, %s103
      %s104 = sphi 0, %s101
      %s105 = sphi 0, %s104
      %s121 = sphi 0, %s105
      %s125 = sphi 0, %s125
      %s127 = sphi 0, %s125
      %s128 = sphi 0, %s127
      %s142 = sphi 0, %s128
      %s146 = sphi 0, %s146
      %s148 = sphi 0, %s146
      %s149 = sphi 0, %s148
      %s163 = sphi 0, %s149
      %s167 = sphi 0, %s167
      %s169 = sphi 0, %s167
      %s170 = sphi 0, %s169
      %s184 = sphi 0, %s170
      %s188 = sphi 0, %s188
      %s190 = sphi 0, %s188
      %s191 = sphi 0, %s190
      %s205 = sphi 0, %s191
      %s209 = sphi 0, %s209
      %s211 = sphi 0, %s209
      %s212 = sphi 0, %s211
      %s226 = sphi 0, %s212
      %s230 = sphi 0, %s230
      %s232 = sphi 0, %s230
      %s233 = sphi 0, %s232
      %s247 = sphi 0, %s233
      %s251 = sphi 0, %s251
      %s253 = sphi 0, %s251
      %s254 = sphi 0, %s253
      %s268 = sphi 0, %s254
      %s272 = sphi 0, %s272
      %s274 = sphi 0, %s272
      %s275 = sphi 0, %s274
      %s289 = sphi 0, %s275
      %s297 = sphi 0, %s299
      %s300 = sphi 0, %s297
      %s301 = sphi 0, %s300
      %s317 = sphi 0, %s301
    $region4: #{tpu_custom_call.1} parent=1 // loop_header_branch
      %30 = sbr.rel (%p28) target = $region8
    $region5: #{tpu_custom_call.1} parent=1 // loop_body
      %s32 = ssub.s32 %s27, 1
      %s33 = ssub.s32 %s27, 2
      %s40 = sadd.s32 1, %s35
      %p41 = scmp.ge.s32.totalorder %s40, 1
      %s42 = scalar_select %p41, 0, %s40
      %s43 = sadd.s32 1, %s34
      %s44 = scalar_select %p41, %s43, %s34
      %p45 = scmp.ge.s32.totalorder %s44, 2
      %s46 = scalar_select %p45, 0, %s44
      %s47 = ssub.s32 %s34, %s46
      %p48 = scmp.eq.s32.totalorder %s47, 0
      %s50 = sadd.s32 %s49, 1
      %s51 = scalar_select %p48, %s49, %s50
      %p54 = pneg %p48
      %p55 = scmp.eq.s32.totalorder %s27, 1
      %p56 = por %p54, %p55
      %p57 = scmp.ne.s32.totalorder %s49, %s52
      %p58 = scmp.eq.s32.totalorder %s27, 0
      %p59 = por %p57, %p58
      %p60 = scmp.ne.s32.totalorder %s49, %s52
      %p61 = scmp.eq.s32.totalorder %s32, 1
      %p62 = por %p60, %p61
      %p63 = scmp.ne.s32.totalorder %s52, %s53
      %p64 = scmp.eq.s32.totalorder %s32, 0
      %p65 = por %p63, %p64
      %p66 = scmp.ne.s32.totalorder %s52, %s53
      %p67 = scmp.eq.s32.totalorder %s33, 1
      %p68 = por %p66, %p67
      %p70 = scmp.ne.s32.totalorder %s53, %s69
      %p71 = scmp.eq.s32.totalorder %s33, 0
      %p72 = por %p70, %p71
      %s73 = ssub.s32 %s34, %s46
      %p74 = scmp.eq.s32.totalorder %s73, 0
      %s76 = sadd.s32 %s75, 1
      %s77 = scalar_select %p74, %s75, %s76
      %p80 = pneg %p74
      %p81 = scmp.eq.s32.totalorder %s27, 1
      %p82 = por %p80, %p81
      %p83 = scmp.ne.s32.totalorder %s75, %s78
      %p84 = scmp.eq.s32.totalorder %s27, 0
      %p85 = por %p83, %p84
      %p86 = scmp.ne.s32.totalorder %s75, %s78
      %p87 = scmp.eq.s32.totalorder %s32, 1
      %p88 = por %p86, %p87
      %p89 = scmp.ne.s32.totalorder %s78, %s79
      %p90 = scmp.eq.s32.totalorder %s32, 0
      %p91 = por %p89, %p90
      %p92 = scmp.ne.s32.totalorder %s78, %s79
      %p93 = scmp.eq.s32.totalorder %s33, 1
      %p94 = por %p92, %p93
      %p96 = scmp.ne.s32.totalorder %s79, %s95
      %p97 = scmp.eq.s32.totalorder %s33, 0
      %p98 = por %p96, %p97
      %s99 = ssub.s32 %s34, %s46
      %p100 = scmp.eq.s32.totalorder %s99, 0
      %s102 = sadd.s32 %s101, 1
      %s103 = scalar_select %p100, %s101, %s102
      %p106 = pneg %p100
      %p107 = scmp.eq.s32.totalorder %s27, 1
      %p108 = por %p106, %p107
      %p109 = scmp.ne.s32.totalorder %s101, %s104
      %p110 = scmp.eq.s32.totalorder %s27, 0
      %p111 = por %p109, %p110
      %p112 = scmp.ne.s32.totalorder %s101, %s104
      %p113 = scmp.eq.s32.totalorder %s32, 1
      %p114 = por %p112, %p113
      %p115 = scmp.ne.s32.totalorder %s104, %s105
      %p116 = scmp.eq.s32.totalorder %s32, 0
      %p117 = por %p115, %p116
      %p118 = scmp.ne.s32.totalorder %s104, %s105
      %p119 = scmp.eq.s32.totalorder %s33, 1
      %p120 = por %p118, %p119
      %p122 = scmp.ne.s32.totalorder %s105, %s121
      %p123 = scmp.eq.s32.totalorder %s33, 0
      %p124 = por %p122, %p123
      %s126 = sadd.s32 %s125, 1
      %p129 = scmp.eq.s32.totalorder %s27, 1
      %p130 = scmp.ne.s32.totalorder %s125, %s127
      %p131 = scmp.eq.s32.totalorder %s27, 0
      %p132 = por %p130, %p131
      %p133 = scmp.ne.s32.totalorder %s125, %s127
      %p134 = scmp.eq.s32.totalorder %s32, 1
      %p135 = por %p133, %p134
      %p136 = scmp.ne.s32.totalorder %s127, %s128
      %p137 = scmp.eq.s32.totalorder %s32, 0
      %p138 = por %p136, %p137
      %p139 = scmp.ne.s32.totalorder %s127, %s128
      %p140 = scmp.eq.s32.totalorder %s33, 1
      %p141 = por %p139, %p140
      %p143 = scmp.ne.s32.totalorder %s128, %s142
      %p144 = scmp.eq.s32.totalorder %s33, 0
      %p145 = por %p143, %p144
      %s147 = sadd.s32 %s146, 1
      %p150 = scmp.eq.s32.totalorder %s27, 1
      %p151 = scmp.ne.s32.totalorder %s146, %s148
      %p152 = scmp.eq.s32.totalorder %s27, 0
      %p153 = por %p151, %p152
      %p154 = scmp.ne.s32.totalorder %s146, %s148
      %p155 = scmp.eq.s32.totalorder %s32, 1
      %p156 = por %p154, %p155
      %p157 = scmp.ne.s32.totalorder %s148, %s149
      %p158 = scmp.eq.s32.totalorder %s32, 0
      %p159 = por %p157, %p158
      %p160 = scmp.ne.s32.totalorder %s148, %s149
      %p161 = scmp.eq.s32.totalorder %s33, 1
      %p162 = por %p160, %p161
      %p164 = scmp.ne.s32.totalorder %s149, %s163
      %p165 = scmp.eq.s32.totalorder %s33, 0
      %p166 = por %p164, %p165
      %s168 = sadd.s32 %s167, 1
      %p171 = scmp.eq.s32.totalorder %s27, 1
      %p172 = scmp.ne.s32.totalorder %s167, %s169
      %p173 = scmp.eq.s32.totalorder %s27, 0
      %p174 = por %p172, %p173
      %p175 = scmp.ne.s32.totalorder %s167, %s169
      %p176 = scmp.eq.s32.totalorder %s32, 1
      %p177 = por %p175, %p176
      %p178 = scmp.ne.s32.totalorder %s169, %s170
      %p179 = scmp.eq.s32.totalorder %s32, 0
      %p180 = por %p178, %p179
      %p181 = scmp.ne.s32.totalorder %s169, %s170
      %p182 = scmp.eq.s32.totalorder %s33, 1
      %p183 = por %p181, %p182
      %p185 = scmp.ne.s32.totalorder %s170, %s184
      %p186 = scmp.eq.s32.totalorder %s33, 0
      %p187 = por %p185, %p186
      %s189 = sadd.s32 %s188, 1
      %p192 = scmp.eq.s32.totalorder %s27, 1
      %p193 = scmp.ne.s32.totalorder %s188, %s190
      %p194 = scmp.eq.s32.totalorder %s27, 0
      %p195 = por %p193, %p194
      %p196 = scmp.ne.s32.totalorder %s188, %s190
      %p197 = scmp.eq.s32.totalorder %s32, 1
      %p198 = por %p196, %p197
      %p199 = scmp.ne.s32.totalorder %s190, %s191
      %p200 = scmp.eq.s32.totalorder %s32, 0
      %p201 = por %p199, %p200
      %p202 = scmp.ne.s32.totalorder %s190, %s191
      %p203 = scmp.eq.s32.totalorder %s33, 1
      %p204 = por %p202, %p203
      %p206 = scmp.ne.s32.totalorder %s191, %s205
      %p207 = scmp.eq.s32.totalorder %s33, 0
      %p208 = por %p206, %p207
      %s210 = sadd.s32 %s209, 1
      %p213 = scmp.eq.s32.totalorder %s27, 1
      %p214 = scmp.ne.s32.totalorder %s209, %s211
      %p215 = scmp.eq.s32.totalorder %s27, 0
      %p216 = por %p214, %p215
      %p217 = scmp.ne.s32.totalorder %s209, %s211
      %p218 = scmp.eq.s32.totalorder %s32, 1
      %p219 = por %p217, %p218
      %p220 = scmp.ne.s32.totalorder %s211, %s212
      %p221 = scmp.eq.s32.totalorder %s32, 0
      %p222 = por %p220, %p221
      %p223 = scmp.ne.s32.totalorder %s211, %s212
      %p224 = scmp.eq.s32.totalorder %s33, 1
      %p225 = por %p223, %p224
      %p227 = scmp.ne.s32.totalorder %s212, %s226
      %p228 = scmp.eq.s32.totalorder %s33, 0
      %p229 = por %p227, %p228
      %s231 = sadd.s32 %s230, 1
      %p234 = scmp.eq.s32.totalorder %s27, 1
      %p235 = scmp.ne.s32.totalorder %s230, %s232
      %p236 = scmp.eq.s32.totalorder %s27, 0
      %p237 = por %p235, %p236
      %p238 = scmp.ne.s32.totalorder %s230, %s232
      %p239 = scmp.eq.s32.totalorder %s32, 1
      %p240 = por %p238, %p239
      %p241 = scmp.ne.s32.totalorder %s232, %s233
      %p242 = scmp.eq.s32.totalorder %s32, 0
      %p243 = por %p241, %p242
      %p244 = scmp.ne.s32.totalorder %s232, %s233
      %p245 = scmp.eq.s32.totalorder %s33, 1
      %p246 = por %p244, %p245
      %p248 = scmp.ne.s32.totalorder %s233, %s247
      %p249 = scmp.eq.s32.totalorder %s33, 0
      %p250 = por %p248, %p249
      %s252 = sadd.s32 %s251, 1
      %p255 = scmp.eq.s32.totalorder %s27, 1
      %p256 = scmp.ne.s32.totalorder %s251, %s253
      %p257 = scmp.eq.s32.totalorder %s27, 0
      %p258 = por %p256, %p257
      %p259 = scmp.ne.s32.totalorder %s251, %s253
      %p260 = scmp.eq.s32.totalorder %s32, 1
      %p261 = por %p259, %p260
      %p262 = scmp.ne.s32.totalorder %s253, %s254
      %p263 = scmp.eq.s32.totalorder %s32, 0
      %p264 = por %p262, %p263
      %p265 = scmp.ne.s32.totalorder %s253, %s254
      %p266 = scmp.eq.s32.totalorder %s33, 1
      %p267 = por %p265, %p266
      %p269 = scmp.ne.s32.totalorder %s254, %s268
      %p270 = scmp.eq.s32.totalorder %s33, 0
      %p271 = por %p269, %p270
      %s273 = sadd.s32 %s272, 1
      %p276 = scmp.eq.s32.totalorder %s27, 1
      %p277 = scmp.ne.s32.totalorder %s272, %s274
      %p278 = scmp.eq.s32.totalorder %s27, 0
      %p279 = por %p277, %p278
      %p280 = scmp.ne.s32.totalorder %s272, %s274
      %p281 = scmp.eq.s32.totalorder %s32, 1
      %p282 = por %p280, %p281
      %p283 = scmp.ne.s32.totalorder %s274, %s275
      %p284 = scmp.eq.s32.totalorder %s32, 0
      %p285 = por %p283, %p284
      %p286 = scmp.ne.s32.totalorder %s274, %s275
      %p287 = scmp.eq.s32.totalorder %s33, 1
      %p288 = por %p286, %p287
      %p290 = scmp.ne.s32.totalorder %s275, %s289
      %p291 = scmp.eq.s32.totalorder %s33, 0
      %p292 = por %p290, %p291
      %s293 = ssub.s32 %s34, %s46
      %s294 = ssub.s32 %s35, %s42
      %s295 = sor.u32 %s293, %s294
      %p296 = scmp.eq.s32.totalorder %s295, 0
      %s298 = sadd.s32 %s297, 1
      %s299 = scalar_select %p296, %s297, %s298
      %p302 = pneg %p296
      %p303 = scmp.eq.s32.totalorder %s27, 1
      %p304 = por %p302, %p303
      %p305 = scmp.ne.s32.totalorder %s297, %s300
      %p306 = scmp.eq.s32.totalorder %s27, 0
      %p307 = por %p305, %p306
      %p308 = scmp.ne.s32.totalorder %s297, %s300
      %p309 = scmp.eq.s32.totalorder %s32, 1
      %p310 = por %p308, %p309
      %p311 = scmp.ne.s32.totalorder %s300, %s301
      %p312 = scmp.eq.s32.totalorder %s32, 0
      %p313 = por %p311, %p312
      %p314 = scmp.ne.s32.totalorder %s300, %s301
      %p315 = scmp.eq.s32.totalorder %s33, 1
      %p316 = por %p314, %p315
      %p318 = scmp.ne.s32.totalorder %s301, %s317
      %p319 = scmp.eq.s32.totalorder %s33, 0
      %p320 = por %p318, %p319
      %p321 = scmp.le.s32.totalorder 1, %s27
      %p322 = scmp.lt.s32.totalorder %s27, 3
      %p323 = pnand %p321, %p322
      %p324 = pneg %p323
      // Predicated region
      $region9: #{tpu_custom_call.1} parent=5 // pred_check
        _
      $region10: #{tpu_custom_call.1} parent=5 // pred_check_branch
        %326 = sbr.rel (%p323) target = $region12
      $region11: #{tpu_custom_call.1} parent=5 // pred_region
        %s327 = ssub.s32 %s27, 1
        // Predicated region
        $region13: #{tpu_custom_call.1} parent=11 // pred_check
          %p328 = pneg %p138
        $region14: #{tpu_custom_call.1} parent=11 // pred_check_branch
          %330 = sbr.rel (%p328) target = $region16
        $region15: #{tpu_custom_call.1} parent=11 // pred_region
          %s332 = ssub.s32 512, 512
          %333 = vsyncadd [#allocation9], %s332
          %s334 = sshll.u32 [#allocation10], 4
          %s335 = int_to_ptr.vmem [resolvable:$true] %s334
          %340 = dma.hbm_to_vmem [thread:$0]  %s3, 512, %s335, [#allocation9], 128, 128, 8
        $region16: #{tpu_custom_call.1} parent=11 // pred_fallthru
          _
        // Predicated region
        $region17: #{tpu_custom_call.1} parent=11 // pred_check
          %p341 = pneg %p159
        $region18: #{tpu_custom_call.1} parent=11 // pred_check_branch
          %343 = sbr.rel (%p341) target = $region20
        $region19: #{tpu_custom_call.1} parent=11 // pred_region
          _
        $region20: #{tpu_custom_call.1} parent=11 // pred_fallthru
          _
        // Predicated region
        $region21: #{tpu_custom_call.1} parent=11 // pred_check
          %p344 = pneg %p180
        $region22: #{tpu_custom_call.1} parent=11 // pred_check_branch
          %346 = sbr.rel (%p344) target = $region24
        $region23: #{tpu_custom_call.1} parent=11 // pred_region
          %s348 = ssub.s32 512, 512
          %349 = vsyncadd [#allocation12], %s348
          %s350 = sshll.u32 [#allocation11], 4
          %s351 = int_to_ptr.vmem [resolvable:$true] %s350
          %356 = dma.hbm_to_vmem [thread:$0]  %s5, 512, %s351, [#allocation12], 128, 128, 8
        $region24: #{tpu_custom_call.1} parent=11 // pred_fallthru
          _
        // Predicated region
        $region25: #{tpu_custom_call.1} parent=11 // pred_check
          %p357 = pneg %p201
        $region26: #{tpu_custom_call.1} parent=11 // pred_check_branch
          %359 = sbr.rel (%p357) target = $region28
        $region27: #{tpu_custom_call.1} parent=11 // pred_region
          _
        $region28: #{tpu_custom_call.1} parent=11 // pred_fallthru
          _
        // Predicated region
        $region29: #{tpu_custom_call.1} parent=11 // pred_check
          %p360 = pneg %p222
        $region30: #{tpu_custom_call.1} parent=11 // pred_check_branch
          %362 = sbr.rel (%p360) target = $region32
        $region31: #{tpu_custom_call.1} parent=11 // pred_region
          %s364 = ssub.s32 512, 512
          %365 = vsyncadd [#allocation12], %s364
          %s366 = sshll.u32 [#allocation13], 4
          %s367 = int_to_ptr.vmem [resolvable:$true] %s366
          %372 = dma.hbm_to_vmem [thread:$0]  %s7, 512, %s367, [#allocation12], 128, 128, 8
        $region32: #{tpu_custom_call.1} parent=11 // pred_fallthru
          _
        // Predicated region
        $region33: #{tpu_custom_call.1} parent=11 // pred_check
          %p373 = pneg %p243
        $region34: #{tpu_custom_call.1} parent=11 // pred_check_branch
          %375 = sbr.rel (%p373) target = $region36
        $region35: #{tpu_custom_call.1} parent=11 // pred_region
          _
        $region36: #{tpu_custom_call.1} parent=11 // pred_fallthru
          _
        // Predicated region
        $region37: #{tpu_custom_call.1} parent=11 // pred_check
          %p376 = pneg %p264
        $region38: #{tpu_custom_call.1} parent=11 // pred_check_branch
          %378 = sbr.rel (%p376) target = $region40
        $region39: #{tpu_custom_call.1} parent=11 // pred_region
          _
        $region40: #{tpu_custom_call.1} parent=11 // pred_fallthru
          _
        // Predicated region
        $region41: #{tpu_custom_call.1} parent=11 // pred_check
          %p379 = pneg %p285
        $region42: #{tpu_custom_call.1} parent=11 // pred_check_branch
          %381 = sbr.rel (%p379) target = $region44
        $region43: #{tpu_custom_call.1} parent=11 // pred_region
          _
        $region44: #{tpu_custom_call.1} parent=11 // pred_fallthru
          _
      $region12: #{tpu_custom_call.1} parent=5 // pred_fallthru
        _
      %p382 = scmp.lt.s32.totalorder %s27, 2
      // Predicated region
      $region45: #{tpu_custom_call.1} parent=5 // pred_check
        %p383 = pneg %p382
      $region46: #{tpu_custom_call.1} parent=5 // pred_check_branch
        %385 = sbr.rel (%p383) target = $region48
      $region47: #{tpu_custom_call.1} parent=5 // pred_region
        // Predicated region
        $region49: #{tpu_custom_call.1} parent=47 // pred_check
          %p386 = pneg %p59
        $region50: #{tpu_custom_call.1} parent=47 // pred_check_branch
          %388 = sbr.rel (%p386) target = $region52
        $region51: #{tpu_custom_call.1} parent=47 // pred_region
          %s389 = sand.u32 %s49, 1
          %s390 = scalar_lea.sflag [#allocation6], %s389
          %s391 = sand.u32 %s49, 1
          %s392 = smul.addr %s391, 8
          %s393 = scalar_lea.vmem [#allocation5], %s392
          %s395 = ssub.s32 128, 128
          %396 = vsyncadd %s390, %s395
          %s397 = smul.addr %s34, 128
          %s398 = scalar_lea.hbm %s0, %s397
          %s400 = sshll.u32 %s393, 4
          %s401 = int_to_ptr.vmem [resolvable:$true] %s400
          %403 = dma.hbm_to_vmem [thread:$0]  %s398, 128, %s401, %s390
        $region52: #{tpu_custom_call.1} parent=47 // pred_fallthru
          _
        // Predicated region
        $region53: #{tpu_custom_call.1} parent=47 // pred_check
          %p404 = pneg %p85
        $region54: #{tpu_custom_call.1} parent=47 // pred_check_branch
          %406 = sbr.rel (%p404) target = $region56
        $region55: #{tpu_custom_call.1} parent=47 // pred_region
          %s407 = sand.u32 %s27, 1
          %s408 = scalar_lea.sflag [#allocation9], %s407
          %s409 = sand.u32 %s75, 1
          %s410 = smul.addr %s409, 8
          %s411 = scalar_lea.vmem [#allocation8], %s410
          %s413 = ssub.s32 128, 128
          %414 = vsyncadd %s408, %s413
          %s415 = smul.addr %s34, 128
          %s416 = scalar_lea.hbm %s1, %s415
          %s418 = sshll.u32 %s411, 4
          %s419 = int_to_ptr.vmem [resolvable:$true] %s418
          %421 = dma.hbm_to_vmem [thread:$0]  %s416, 128, %s419, %s408
        $region56: #{tpu_custom_call.1} parent=47 // pred_fallthru
          _
        // Predicated region
        $region57: #{tpu_custom_call.1} parent=47 // pred_check
          %p422 = pneg %p111
        $region58: #{tpu_custom_call.1} parent=47 // pred_check_branch
          %424 = sbr.rel (%p422) target = $region60
        $region59: #{tpu_custom_call.1} parent=47 // pred_region
          %p425 = scmp.lt.s32.totalorder %s34, 1
          %s426 = scalar_select %p425, %s34, 1
          %s427 = scalar_lea.vmem %s2, %s426
        $region60: #{tpu_custom_call.1} parent=47 // pred_fallthru
          _
      $region48: #{tpu_custom_call.1} parent=5 // pred_fallthru
        _
      %p428 = scmp.le.s32.totalorder 1, %s27
      %p429 = scmp.lt.s32.totalorder %s27, 3
      %p430 = pnand %p428, %p429
      %p431 = pneg %p430
      // Predicated region
      $region61: #{tpu_custom_call.1} parent=5 // pred_check
        _
      $region62: #{tpu_custom_call.1} parent=5 // pred_check_branch
        %433 = sbr.rel (%p430) target = $region64
      $region63: #{tpu_custom_call.1} parent=5 // pred_region
        %s434 = ssub.s32 %s27, 1
        %s435 = sand.u32 %s52, 1
        %s436 = scalar_lea.sflag [#allocation6], %s435
        %s437 = sand.u32 %s52, 1
        %s438 = smul.addr %s437, 8
        %s439 = scalar_lea.vmem [#allocation5], %s438
        // Predicated region
        $region65: #{tpu_custom_call.1} parent=63 // pred_check
          %p440 = pneg %p65
        $region66: #{tpu_custom_call.1} parent=63 // pred_check_branch
          %442 = sbr.rel (%p440) target = $region68
        $region67: #{tpu_custom_call.1} parent=63 // pred_region
          %443 = dma.done %s436, 128
        $region68: #{tpu_custom_call.1} parent=63 // pred_fallthru
          _
        %s444 = sand.u32 %s32, 1
        %s445 = scalar_lea.sflag [#allocation9], %s444
        %s446 = sand.u32 %s78, 1
        %s447 = smul.addr %s446, 8
        %s448 = scalar_lea.vmem [#allocation8], %s447
        // Predicated region
        $region69: #{tpu_custom_call.1} parent=63 // pred_check
          %p449 = pneg %p91
        $region70: #{tpu_custom_call.1} parent=63 // pred_check_branch
          %451 = sbr.rel (%p449) target = $region72
        $region71: #{tpu_custom_call.1} parent=63 // pred_region
          %452 = dma.done %s445, 128
        $region72: #{tpu_custom_call.1} parent=63 // pred_fallthru
          _
        // Predicated region
        $region73: #{tpu_custom_call.1} parent=63 // pred_check
          %p453 = pneg %p138
        $region74: #{tpu_custom_call.1} parent=63 // pred_check_branch
          %455 = sbr.rel (%p453) target = $region76
        $region75: #{tpu_custom_call.1} parent=63 // pred_region
          %456 = dma.done [#allocation9], 512
        $region76: #{tpu_custom_call.1} parent=63 // pred_fallthru
          _
        // Predicated region
        $region77: #{tpu_custom_call.1} parent=63 // pred_check
          %p457 = pneg %p180
        $region78: #{tpu_custom_call.1} parent=63 // pred_check_branch
          %459 = sbr.rel (%p457) target = $region80
        $region79: #{tpu_custom_call.1} parent=63 // pred_region
          %460 = dma.done [#allocation12], 512
        $region80: #{tpu_custom_call.1} parent=63 // pred_fallthru
          _
        // Predicated region
        $region81: #{tpu_custom_call.1} parent=63 // pred_check
          %p461 = pneg %p222
        $region82: #{tpu_custom_call.1} parent=63 // pred_check_branch
          %463 = sbr.rel (%p461) target = $region84
        $region83: #{tpu_custom_call.1} parent=63 // pred_region
          %464 = dma.done [#allocation12], 512
        $region84: #{tpu_custom_call.1} parent=63 // pred_fallthru
          _
        %s465 = sand.u32 %s52, 1
        %s466 = scalar_lea.sflag [#allocation6], %s465
        %s467 = sand.u32 %s52, 1
        %s468 = smul.addr %s467, 8
        %s469 = scalar_lea.vmem [#allocation5], %s468
        %p470 = pneg %p65
        %p471 = pneg %p62
        %s472 = sand.u32 %s32, 1
        %s473 = scalar_lea.sflag [#allocation9], %s472
        %s474 = sand.u32 %s78, 1
        %s475 = smul.addr %s474, 8
        %s476 = scalar_lea.vmem [#allocation8], %s475
        %p477 = pneg %p91
        %p478 = pneg %p88
        %p479 = scmp.lt.s32.totalorder %s36, 1
        %s480 = scalar_select %p479, %s36, 1
        %s481 = scalar_lea.vmem %s2, %s480
        %p482 = pneg %p117
        %p483 = pneg %p114
        %p484 = pneg %p138
        %p485 = pneg %p135
        %p486 = pneg %p159
        %p487 = pneg %p156
        %p488 = pneg %p180
        %p489 = pneg %p177
        %p490 = pneg %p201
        %p491 = pneg %p198
        %p492 = pneg %p222
        %p493 = pneg %p219
        %p494 = pneg %p243
        %p495 = pneg %p240
        %p496 = pneg %p264
        %p497 = pneg %p261
        %p498 = pneg %p285
        %p499 = pneg %p282
        %p500 = pneg %p313
        %p501 = pneg %p310
        %s502 = sand.u32 %s300, 1
        %s503 = scalar_lea.sflag [#allocation7], %s502
        %s504 = sand.u32 %s300, 1
        %s505 = smul.addr %s504, 8
        %s506 = scalar_lea.vmem [#allocation14], %s505
        %p507 = scmp.lt.s32.totalorder %s36, 1
        %s508 = scalar_select %p507, %s36, 1
        %s509 = scalar_lea.vmem %s2, %s508
        %p510 = scmp.eq.s32.totalorder %s37, 0
        // Predicated region
        $region85: #{tpu_custom_call.1} parent=63 // pred_check
          %p511 = pneg %p510
        $region86: #{tpu_custom_call.1} parent=63 // pred_check_branch
          %513 = sbr.rel (%p511) target = $region88
        $region87: #{tpu_custom_call.1} parent=63 // pred_region
          %v514 = vld [vmem:[%s439] sm:$0xff]
          %v515 = vld [vmem:[%s448] sm:$0xff]
          %v516 = vadd.f32 %v514, %v515
          %v517 = vld [vmem:[#allocation10] sm:$0xff]
          %v518 = vld [vmem:[#allocation10 + $0x8] sm:$0xff]
          %v519 = vld [vmem:[#allocation10 + $0x10] sm:$0xff]
          %v520 = vld [vmem:[#allocation10 + $0x18] sm:$0xff]
          %v521 = vld [vmem:[%s4] sm:$0x1]
          %v523 = vlaneseq
          %v524 = vshrl.u32 %v523, 7
          %v525 = vsub.s32 0, %v524
          %v526 = vrot.slane %v521, %v525
          %vm528 = vcmask 261120
          %v530 = vsel %vm528, %v516, 0
          %532 = vmatprep.subr.mxu0 0.0
          %533 = vmatpush1.msra.mxu0 %v517
          %534 = vmatprep.subr.mxu0 0.0
          %535 = vmatpush1.msra.mxu0 %v518
          %536 = vmatprep.subr.mxu0 0.0
          %537 = vmatpush1.msra.mxu0 %v519
          %538 = vmatprep.subr.mxu0 0.0
          %539 = vmatpush1.msra.mxu0 %v520
          %540 = vmatprep.subr.mxu0 0.0
          %541 = vmatpush1.msra.mxu0 0.0
          %542 = vmatprep.subr.mxu0 0.0
          %543 = vmatpush1.msra.mxu0 0.0
          %544 = vmatprep.subr.mxu0 0.0
          %545 = vmatpush1.msra.mxu0 0.0
          %546 = vmatprep.subr.mxu0 0.0
          %547 = vmatpush1.msra.mxu0 0.0
          %548 = vmatprep.subr.mxu0 0.0
          %549 = vmatpush1.msra.mxu0 0.0
          %550 = vmatprep.subr.mxu0 0.0
          %551 = vmatpush1.msra.mxu0 0.0
          %552 = vmatprep.subr.mxu0 0.0
          %553 = vmatpush1.msra.mxu0 0.0
          %554 = vmatprep.subr.mxu0 0.0
          %555 = vmatpush1.msra.mxu0 0.0
          %556 = vmatprep.subr.mxu0 0.0
          %557 = vmatpush1.msra.mxu0 0.0
          %558 = vmatprep.subr.mxu0 0.0
          %559 = vmatpush1.msra.mxu0 0.0
          %560 = vmatprep.subr.mxu0 0.0
          %561 = vmatpush1.msra.mxu0 0.0
          %562 = vmatprep.subr.mxu0 0.0
          %563 = vmatpush1.msra.mxu0 0.0
          %564 = vmatprep.subr.mxu0 0.0
          %565 = vmatpush1.msra.mxu0 0.0
          %566 = vmatprep.subr.mxu0 0.0
          %567 = vmatpush1.msra.mxu0 0.0
          %568 = vmatprep.subr.mxu0 0.0
          %569 = vmatpush1.msra.mxu0 0.0
          %570 = vmatprep.subr.mxu0 0.0
          %571 = vmatpush1.msra.mxu0 0.0
          %572 = vmatprep.subr.mxu0 0.0
          %573 = vmatpush1.msra.mxu0 0.0
          %574 = vmatprep.subr.mxu0 0.0
          %575 = vmatpush1.msra.mxu0 0.0
          %576 = vmatprep.subr.mxu0 0.0
          %577 = vmatpush1.msra.mxu0 0.0
          %578 = vmatprep.subr.mxu0 0.0
          %579 = vmatpush1.msra.mxu0 0.0
          %580 = vmatprep.subr.mxu0 0.0
          %581 = vmatpush1.msra.mxu0 0.0
          %582 = vmatprep.subr.mxu0 0.0
          %583 = vmatpush1.msra.mxu0 0.0
          %584 = vmatprep.subr.mxu0 0.0
          %585 = vmatpush1.msra.mxu0 0.0
          %586 = vmatprep.subr.mxu0 0.0
          %587 = vmatpush1.msra.mxu0 0.0
          %588 = vmatprep.subr.mxu0 0.0
          %589 = vmatpush1.msra.mxu0 0.0
          %590 = vmatprep.subr.mxu0 0.0
          %591 = vmatpush1.msra.mxu0 0.0
          %592 = vmatprep.subr.mxu0 0.0
          %593 = vmatpush1.msra.mxu0 0.0
          %594 = vmatprep.subr.mxu0 0.0
          %595 = vmatpush1.msra.mxu0 0.0
          %596 = vmatprep.mubr.f32.mxu0 0.0
          %597 = vmatmul.mubr.f32.gmra.mrb[0].mxu0 %v530
          %v598 = vpop.f32.mrb[0].mxu0
          %v599 = vadd.f32 %v526, %v598
          %v600 = vpop.f32.mrb[0].mxu0
          %601 = vdwg.mxu0
          %v602 = vmul.f32 %v599, 0.35355338
          %603 = vst.msk [vmem:[#allocation2] sm:$0xff] %vm528, %v602
          %605 = vrot.lane.b32.xlu0 %v599, 96
          %v606 = vpop.permute.xlu0 %605
          %608 = vxpose.xlu0.b32.start [1/16] %v606, 128
          %609 = vxpose.xlu0.b32.cont [2/16] 0.0, 128
          %610 = vxpose.xlu0.b32.cont [3/16] 0.0, 128
          %611 = vxpose.xlu0.b32.cont [4/16] 0.0, 128
          %612 = vxpose.xlu0.b32.cont [5/16] 0.0, 128
          %613 = vxpose.xlu0.b32.cont [6/16] 0.0, 128
          %614 = vxpose.xlu0.b32.cont [7/16] 0.0, 128
          %615 = vxpose.xlu0.b32.cont [8/16] 0.0, 128
          %616 = vxpose.xlu0.b32.cont [9/16] 0.0, 128
          %617 = vxpose.xlu0.b32.cont [10/16] 0.0, 128
          %618 = vxpose.xlu0.b32.cont [11/16] 0.0, 128
          %619 = vxpose.xlu0.b32.cont [12/16] 0.0, 128
          %620 = vxpose.xlu0.b32.cont [13/16] 0.0, 128
          %621 = vxpose.xlu0.b32.cont [14/16] 0.0, 128
          %622 = vxpose.xlu0.b32.cont [15/16] 0.0, 128
          %623 = vxpose.xlu0.b32.end [16/16] 0.0, 128
          %v624 = vpop.trf.xlu0
          %v625 = vpop.trf.xlu0
          %v626 = vpop.trf.xlu0
          %v627 = vpop.trf.xlu0
          %v628 = vpop.trf.xlu0
          %v629 = vpop.trf.xlu0
          %v630 = vpop.trf.xlu0
          %v631 = vpop.trf.xlu0
          %v632 = vpop.trf.xlu0
          %v633 = vpop.trf.xlu0
          %v634 = vpop.trf.xlu0
          %v635 = vpop.trf.xlu0
          %v636 = vpop.trf.xlu0
          %v637 = vpop.trf.xlu0
          %v638 = vpop.trf.xlu0
          %v639 = vpop.trf.xlu0
          %vm640 = vcmask 64512
          %641 = vst.msk [vmem:[#allocation3] sm:$0xff] %vm640, %v624
          %642 = vst.msk [vmem:[#allocation3 + $0x8] sm:$0xff] %vm640, %v625
          %643 = vst.msk [vmem:[#allocation3 + $0x10] sm:$0xff] %vm640, %v626
          %644 = vst.msk [vmem:[#allocation3 + $0x18] sm:$0xff] %vm640, %v627
          %v645 = vld [vmem:[#allocation11] sm:$0xff]
          %v646 = vld [vmem:[#allocation11 + $0x8] sm:$0xff]
          %v647 = vld [vmem:[#allocation11 + $0x10] sm:$0xff]
          %v648 = vld [vmem:[#allocation11 + $0x18] sm:$0xff]
          %v649 = vld [vmem:[%s6] sm:$0x1]
          %v651 = vlaneseq
          %v652 = vshrl.u32 %v651, 7
          %v653 = vsub.s32 0, %v652
          %v654 = vrot.slane %v649, %v653
          %v657 = vsel %vm528, %v514, 0
          %659 = vmatprep.subr.mxu0 0.0
          %660 = vmatpush1.msra.mxu0 %v645
          %661 = vmatprep.subr.mxu0 0.0
          %662 = vmatpush1.msra.mxu0 %v646
          %663 = vmatprep.subr.mxu0 0.0
          %664 = vmatpush1.msra.mxu0 %v647
          %665 = vmatprep.subr.mxu0 0.0
          %666 = vmatpush1.msra.mxu0 %v648
          %667 = vmatprep.subr.mxu0 0.0
          %668 = vmatpush1.msra.mxu0 0.0
          %669 = vmatprep.subr.mxu0 0.0
          %670 = vmatpush1.msra.mxu0 0.0
          %671 = vmatprep.subr.mxu0 0.0
          %672 = vmatpush1.msra.mxu0 0.0
          %673 = vmatprep.subr.mxu0 0.0
          %674 = vmatpush1.msra.mxu0 0.0
          %675 = vmatprep.subr.mxu0 0.0
          %676 = vmatpush1.msra.mxu0 0.0
          %677 = vmatprep.subr.mxu0 0.0
          %678 = vmatpush1.msra.mxu0 0.0
          %679 = vmatprep.subr.mxu0 0.0
          %680 = vmatpush1.msra.mxu0 0.0
          %681 = vmatprep.subr.mxu0 0.0
          %682 = vmatpush1.msra.mxu0 0.0
          %683 = vmatprep.subr.mxu0 0.0
          %684 = vmatpush1.msra.mxu0 0.0
          %685 = vmatprep.subr.mxu0 0.0
          %686 = vmatpush1.msra.mxu0 0.0
          %687 = vmatprep.subr.mxu0 0.0
          %688 = vmatpush1.msra.mxu0 0.0
          %689 = vmatprep.subr.mxu0 0.0
          %690 = vmatpush1.msra.mxu0 0.0
          %691 = vmatprep.subr.mxu0 0.0
          %692 = vmatpush1.msra.mxu0 0.0
          %693 = vmatprep.subr.mxu0 0.0
          %694 = vmatpush1.msra.mxu0 0.0
          %695 = vmatprep.subr.mxu0 0.0
          %696 = vmatpush1.msra.mxu0 0.0
          %697 = vmatprep.subr.mxu0 0.0
          %698 = vmatpush1.msra.mxu0 0.0
          %699 = vmatprep.subr.mxu0 0.0
          %700 = vmatpush1.msra.mxu0 0.0
          %701 = vmatprep.subr.mxu0 0.0
          %702 = vmatpush1.msra.mxu0 0.0
          %703 = vmatprep.subr.mxu0 0.0
          %704 = vmatpush1.msra.mxu0 0.0
          %705 = vmatprep.subr.mxu0 0.0
          %706 = vmatpush1.msra.mxu0 0.0
          %707 = vmatprep.subr.mxu0 0.0
          %708 = vmatpush1.msra.mxu0 0.0
          %709 = vmatprep.subr.mxu0 0.0
          %710 = vmatpush1.msra.mxu0 0.0
          %711 = vmatprep.subr.mxu0 0.0
          %712 = vmatpush1.msra.mxu0 0.0
          %713 = vmatprep.subr.mxu0 0.0
          %714 = vmatpush1.msra.mxu0 0.0
          %715 = vmatprep.subr.mxu0 0.0
          %716 = vmatpush1.msra.mxu0 0.0
          %717 = vmatprep.subr.mxu0 0.0
          %718 = vmatpush1.msra.mxu0 0.0
          %719 = vmatprep.subr.mxu0 0.0
          %720 = vmatpush1.msra.mxu0 0.0
          %721 = vmatprep.subr.mxu0 0.0
          %722 = vmatpush1.msra.mxu0 0.0
          %723 = vmatprep.mubr.f32.mxu0 0.0
          %724 = vmatmul.mubr.f32.gmra.mrb[0].mxu0 %v657
          %v725 = vpop.f32.mrb[0].mxu0
          %v726 = vadd.f32 %v654, %v725
          %v727 = vpop.f32.mrb[0].mxu0
          %728 = vdwg.mxu0
          %729 = vst.msk [vmem:[#allocation4] sm:$0xff] %vm528, %v726
        $region88: #{tpu_custom_call.1} parent=63 // pred_fallthru
          _
        %s730 = smul.u32 %s37, 8
        %s731 = scalar_lea.vmem [#allocation2], %s730
        %v732 = vld [vmem:[%s731] sm:$0xff]
        %v733 = vld [vmem:[%s509] sm:$0x1]
        %v734 = vld [vmem:[#allocation3] sm:$0xff]
        %v736 = vlaneseq
        %v737 = vshrl.u32 %v736, 7
        %v738 = vsub.s32 0, %v737
        %v739 = vrot.slane %v733, %v738
        %vm741 = vcmask 64512
        %v743 = vsel %vm741, %v732, 0
        %745 = vmatprep.subr.mxu0 0.0
        %746 = vmatpush1.msra.mxu0 %v734
        %747 = vmatprep.subr.mxu0 0.0
        %748 = vmatpush1.msra.mxu0 0.0
        %749 = vmatprep.subr.mxu0 0.0
        %750 = vmatpush1.msra.mxu0 0.0
        %751 = vmatprep.subr.mxu0 0.0
        %752 = vmatpush1.msra.mxu0 0.0
        %753 = vmatprep.subr.mxu0 0.0
        %754 = vmatpush1.msra.mxu0 0.0
        %755 = vmatprep.subr.mxu0 0.0
        %756 = vmatpush1.msra.mxu0 0.0
        %757 = vmatprep.subr.mxu0 0.0
        %758 = vmatpush1.msra.mxu0 0.0
        %759 = vmatprep.subr.mxu0 0.0
        %760 = vmatpush1.msra.mxu0 0.0
        %761 = vmatprep.subr.mxu0 0.0
        %762 = vmatpush1.msra.mxu0 0.0
        %763 = vmatprep.subr.mxu0 0.0
        %764 = vmatpush1.msra.mxu0 0.0
        %765 = vmatprep.subr.mxu0 0.0
        %766 = vmatpush1.msra.mxu0 0.0
        %767 = vmatprep.subr.mxu0 0.0
        %768 = vmatpush1.msra.mxu0 0.0
        %769 = vmatprep.subr.mxu0 0.0
        %770 = vmatpush1.msra.mxu0 0.0
        %771 = vmatprep.subr.mxu0 0.0
        %772 = vmatpush1.msra.mxu0 0.0
        %773 = vmatprep.subr.mxu0 0.0
        %774 = vmatpush1.msra.mxu0 0.0
        %775 = vmatprep.subr.mxu0 0.0
        %776 = vmatpush1.msra.mxu0 0.0
        %777 = vmatprep.subr.mxu0 0.0
        %778 = vmatpush1.msra.mxu0 0.0
        %779 = vmatprep.subr.mxu0 0.0
        %780 = vmatpush1.msra.mxu0 0.0
        %781 = vmatprep.subr.mxu0 0.0
        %782 = vmatpush1.msra.mxu0 0.0
        %783 = vmatprep.subr.mxu0 0.0
        %784 = vmatpush1.msra.mxu0 0.0
        %785 = vmatprep.subr.mxu0 0.0
        %786 = vmatpush1.msra.mxu0 0.0
        %787 = vmatprep.subr.mxu0 0.0
        %788 = vmatpush1.msra.mxu0 0.0
        %789 = vmatprep.subr.mxu0 0.0
        %790 = vmatpush1.msra.mxu0 0.0
        %791 = vmatprep.subr.mxu0 0.0
        %792 = vmatpush1.msra.mxu0 0.0
        %793 = vmatprep.subr.mxu0 0.0
        %794 = vmatpush1.msra.mxu0 0.0
        %795 = vmatprep.subr.mxu0 0.0
        %796 = vmatpush1.msra.mxu0 0.0
        %797 = vmatprep.subr.mxu0 0.0
        %798 = vmatpush1.msra.mxu0 0.0
        %799 = vmatprep.subr.mxu0 0.0
        %800 = vmatpush1.msra.mxu0 0.0
        %801 = vmatprep.subr.mxu0 0.0
        %802 = vmatpush1.msra.mxu0 0.0
        %803 = vmatprep.subr.mxu0 0.0
        %804 = vmatpush1.msra.mxu0 0.0
        %805 = vmatprep.subr.mxu0 0.0
        %806 = vmatpush1.msra.mxu0 0.0
        %807 = vmatprep.subr.mxu0 0.0
        %808 = vmatpush1.msra.mxu0 0.0
        %809 = vmatprep.mubr.f32.mxu0 0.0
        %810 = vmatmul.mubr.f32.gmra.mrb[0].mxu0 %v743
        %v811 = vpop.f32.mrb[0].mxu0
        %v812 = vadd.f32 %v739, %v811
        %v813 = vpop.f32.mrb[0].mxu0
        %814 = vdwg.mxu0
        %v815 = vsel %vm741, %v812, -inf
        %816 = vmax.xlane.f32.xlu0 %v815
        %v817 = vpop.xlane.xlu0 %816
        %v818 = vsub.f32 %v812, %v817
        %v819 = vmul.f32 %v818, 1.442695
        %v820 = vpow.pop %v819
        %v821 = vsel %vm741, %v820, 0.0
        %822 = vadd.xlane.f32.xlu0 %v821
        %v823 = vpop.xlane.xlu0 %822
        %v824 = vld [vmem:[#allocation4] sm:$0xff]
        %v826 = vsel %vm741, %v820, 0
        %828 = vmatprep.subr.mxu0 0.0
        %829 = vmatpush1.msra.mxu0 %v824
        %830 = vmatprep.subr.mxu0 0.0
        %831 = vmatpush1.msra.mxu0 0.0
        %832 = vmatprep.subr.mxu0 0.0
        %833 = vmatpush1.msra.mxu0 0.0
        %834 = vmatprep.subr.mxu0 0.0
        %835 = vmatpush1.msra.mxu0 0.0
        %836 = vmatprep.subr.mxu0 0.0
        %837 = vmatpush1.msra.mxu0 0.0
        %838 = vmatprep.subr.mxu0 0.0
        %839 = vmatpush1.msra.mxu0 0.0
        %840 = vmatprep.subr.mxu0 0.0
        %841 = vmatpush1.msra.mxu0 0.0
        %842 = vmatprep.subr.mxu0 0.0
        %843 = vmatpush1.msra.mxu0 0.0
        %844 = vmatprep.subr.mxu0 0.0
        %845 = vmatpush1.msra.mxu0 0.0
        %846 = vmatprep.subr.mxu0 0.0
        %847 = vmatpush1.msra.mxu0 0.0
        %848 = vmatprep.subr.mxu0 0.0
        %849 = vmatpush1.msra.mxu0 0.0
        %850 = vmatprep.subr.mxu0 0.0
        %851 = vmatpush1.msra.mxu0 0.0
        %852 = vmatprep.subr.mxu0 0.0
        %853 = vmatpush1.msra.mxu0 0.0
        %854 = vmatprep.subr.mxu0 0.0
        %855 = vmatpush1.msra.mxu0 0.0
        %856 = vmatprep.subr.mxu0 0.0
        %857 = vmatpush1.msra.mxu0 0.0
        %858 = vmatprep.subr.mxu0 0.0
        %859 = vmatpush1.msra.mxu0 0.0
        %860 = vmatprep.subr.mxu0 0.0
        %861 = vmatpush1.msra.mxu0 0.0
        %862 = vmatprep.subr.mxu0 0.0
        %863 = vmatpush1.msra.mxu0 0.0
        %864 = vmatprep.subr.mxu0 0.0
        %865 = vmatpush1.msra.mxu0 0.0
        %866 = vmatprep.subr.mxu0 0.0
        %867 = vmatpush1.msra.mxu0 0.0
        %868 = vmatprep.subr.mxu0 0.0
        %869 = vmatpush1.msra.mxu0 0.0
        %870 = vmatprep.subr.mxu0 0.0
        %871 = vmatpush1.msra.mxu0 0.0
        %872 = vmatprep.subr.mxu0 0.0
        %873 = vmatpush1.msra.mxu0 0.0
        %874 = vmatprep.subr.mxu0 0.0
        %875 = vmatpush1.msra.mxu0 0.0
        %876 = vmatprep.subr.mxu0 0.0
        %877 = vmatpush1.msra.mxu0 0.0
        %878 = vmatprep.subr.mxu0 0.0
        %879 = vmatpush1.msra.mxu0 0.0
        %880 = vmatprep.subr.mxu0 0.0
        %881 = vmatpush1.msra.mxu0 0.0
        %882 = vmatprep.subr.mxu0 0.0
        %883 = vmatpush1.msra.mxu0 0.0
        %884 = vmatprep.subr.mxu0 0.0
        %885 = vmatpush1.msra.mxu0 0.0
        %886 = vmatprep.subr.mxu0 0.0
        %887 = vmatpush1.msra.mxu0 0.0
        %888 = vmatprep.subr.mxu0 0.0
        %889 = vmatpush1.msra.mxu0 0.0
        %890 = vmatprep.subr.mxu0 0.0
        %891 = vmatpush1.msra.mxu0 0.0
        %892 = vmatprep.mubr.f32.mxu0 0.0
        %893 = vmatmul.mubr.f32.gmra.mrb[0].mxu0 %v826
        %v894 = vpop.f32.mrb[0].mxu0
        %v895 = vadd.f32 0.0, %v894
        %v896 = vpop.f32.mrb[0].mxu0
        %897 = vdwg.mxu0
        %v898 = vrcp.pop %v823
        %v899 = vmul.f32 %v895, %v898
        %v900 = vld [vmem:[#allocation3 + $0x8] sm:$0xff]
        %901 = vrot.lane.b32.xlu0 %v732, 120
        %v902 = vpop.permute.xlu0 %901
        %v903 = vsel %vm741, %v902, 0
        %905 = vmatprep.subr.mxu0 0.0
        %906 = vmatpush1.msra.mxu0 %v900
        %907 = vmatprep.subr.mxu0 0.0
        %908 = vmatpush1.msra.mxu0 0.0
        %909 = vmatprep.subr.mxu0 0.0
        %910 = vmatpush1.msra.mxu0 0.0
        %911 = vmatprep.subr.mxu0 0.0
        %912 = vmatpush1.msra.mxu0 0.0
        %913 = vmatprep.subr.mxu0 0.0
        %914 = vmatpush1.msra.mxu0 0.0
        %915 = vmatprep.subr.mxu0 0.0
        %916 = vmatpush1.msra.mxu0 0.0
        %917 = vmatprep.subr.mxu0 0.0
        %918 = vmatpush1.msra.mxu0 0.0
        %919 = vmatprep.subr.mxu0 0.0
        %920 = vmatpush1.msra.mxu0 0.0
        %921 = vmatprep.subr.mxu0 0.0
        %922 = vmatpush1.msra.mxu0 0.0
        %923 = vmatprep.subr.mxu0 0.0
        %924 = vmatpush1.msra.mxu0 0.0
        %925 = vmatprep.subr.mxu0 0.0
        %926 = vmatpush1.msra.mxu0 0.0
        %927 = vmatprep.subr.mxu0 0.0
        %928 = vmatpush1.msra.mxu0 0.0
        %929 = vmatprep.subr.mxu0 0.0
        %930 = vmatpush1.msra.mxu0 0.0
        %931 = vmatprep.subr.mxu0 0.0
        %932 = vmatpush1.msra.mxu0 0.0
        %933 = vmatprep.subr.mxu0 0.0
        %934 = vmatpush1.msra.mxu0 0.0
        %935 = vmatprep.subr.mxu0 0.0
        %936 = vmatpush1.msra.mxu0 0.0
        %937 = vmatprep.subr.mxu0 0.0
        %938 = vmatpush1.msra.mxu0 0.0
        %939 = vmatprep.subr.mxu0 0.0
        %940 = vmatpush1.msra.mxu0 0.0
        %941 = vmatprep.subr.mxu0 0.0
        %942 = vmatpush1.msra.mxu0 0.0
        %943 = vmatprep.subr.mxu0 0.0
        %944 = vmatpush1.msra.mxu0 0.0
        %945 = vmatprep.subr.mxu0 0.0
        %946 = vmatpush1.msra.mxu0 0.0
        %947 = vmatprep.subr.mxu0 0.0
        %948 = vmatpush1.msra.mxu0 0.0
        %949 = vmatprep.subr.mxu0 0.0
        %950 = vmatpush1.msra.mxu0 0.0
        %951 = vmatprep.subr.mxu0 0.0
        %952 = vmatpush1.msra.mxu0 0.0
        %953 = vmatprep.subr.mxu0 0.0
        %954 = vmatpush1.msra.mxu0 0.0
        %955 = vmatprep.subr.mxu0 0.0
        %956 = vmatpush1.msra.mxu0 0.0
        %957 = vmatprep.subr.mxu0 0.0
        %958 = vmatpush1.msra.mxu0 0.0
        %959 = vmatprep.subr.mxu0 0.0
        %960 = vmatpush1.msra.mxu0 0.0
        %961 = vmatprep.subr.mxu0 0.0
        %962 = vmatpush1.msra.mxu0 0.0
        %963 = vmatprep.subr.mxu0 0.0
        %964 = vmatpush1.msra.mxu0 0.0
        %965 = vmatprep.subr.mxu0 0.0
        %966 = vmatpush1.msra.mxu0 0.0
        %967 = vmatprep.subr.mxu0 0.0
        %968 = vmatpush1.msra.mxu0 0.0
        %969 = vmatprep.mubr.f32.mxu0 0.0
        %970 = vmatmul.mubr.f32.gmra.mrb[0].mxu0 %v903
        %v971 = vpop.f32.mrb[0].mxu0
        %v972 = vadd.f32 %v739, %v971
        %v973 = vpop.f32.mrb[0].mxu0
        %974 = vdwg.mxu0
        %v975 = vsel %vm741, %v972, -inf
        %976 = vmax.xlane.f32.xlu0 %v975
        %v977 = vpop.xlane.xlu0 %976
        %v978 = vsub.f32 %v972, %v977
        %v979 = vmul.f32 %v978, 1.442695
        %v980 = vpow.pop %v979
        %v981 = vsel %vm741, %v980, 0.0
        %982 = vadd.xlane.f32.xlu0 %v981
        %v983 = vpop.xlane.xlu0 %982
        %985 = vrot.lane.b32.xlu0 %v824, 120
        %v986 = vpop.permute.xlu0 %985
        %v989 = vsel %vm741, %v980, 0
        %991 = vmatprep.subr.mxu0 0.0
        %992 = vmatpush1.msra.mxu0 %v986
        %993 = vmatprep.subr.mxu0 0.0
        %994 = vmatpush1.msra.mxu0 0.0
        %995 = vmatprep.subr.mxu0 0.0
        %996 = vmatpush1.msra.mxu0 0.0
        %997 = vmatprep.subr.mxu0 0.0
        %998 = vmatpush1.msra.mxu0 0.0
        %999 = vmatprep.subr.mxu0 0.0
        %1000 = vmatpush1.msra.mxu0 0.0
        %1001 = vmatprep.subr.mxu0 0.0
        %1002 = vmatpush1.msra.mxu0 0.0
        %1003 = vmatprep.subr.mxu0 0.0
        %1004 = vmatpush1.msra.mxu0 0.0
        %1005 = vmatprep.subr.mxu0 0.0
        %1006 = vmatpush1.msra.mxu0 0.0
        %1007 = vmatprep.subr.mxu0 0.0
        %1008 = vmatpush1.msra.mxu0 0.0
        %1009 = vmatprep.subr.mxu0 0.0
        %1010 = vmatpush1.msra.mxu0 0.0
        %1011 = vmatprep.subr.mxu0 0.0
        %1012 = vmatpush1.msra.mxu0 0.0
        %1013 = vmatprep.subr.mxu0 0.0
        %1014 = vmatpush1.msra.mxu0 0.0
        %1015 = vmatprep.subr.mxu0 0.0
        %1016 = vmatpush1.msra.mxu0 0.0
        %1017 = vmatprep.subr.mxu0 0.0
        %1018 = vmatpush1.msra.mxu0 0.0
        %1019 = vmatprep.subr.mxu0 0.0
        %1020 = vmatpush1.msra.mxu0 0.0
        %1021 = vmatprep.subr.mxu0 0.0
        %1022 = vmatpush1.msra.mxu0 0.0
        %1023 = vmatprep.subr.mxu0 0.0
        %1024 = vmatpush1.msra.mxu0 0.0
        %1025 = vmatprep.subr.mxu0 0.0
        %1026 = vmatpush1.msra.mxu0 0.0
        %1027 = vmatprep.subr.mxu0 0.0
        %1028 = vmatpush1.msra.mxu0 0.0
        %1029 = vmatprep.subr.mxu0 0.0
        %1030 = vmatpush1.msra.mxu0 0.0
        %1031 = vmatprep.subr.mxu0 0.0
        %1032 = vmatpush1.msra.mxu0 0.0
        %1033 = vmatprep.subr.mxu0 0.0
        %1034 = vmatpush1.msra.mxu0 0.0
        %1035 = vmatprep.subr.mxu0 0.0
        %1036 = vmatpush1.msra.mxu0 0.0
        %1037 = vmatprep.subr.mxu0 0.0
        %1038 = vmatpush1.msra.mxu0 0.0
        %1039 = vmatprep.subr.mxu0 0.0
        %1040 = vmatpush1.msra.mxu0 0.0
        %1041 = vmatprep.subr.mxu0 0.0
        %1042 = vmatpush1.msra.mxu0 0.0
        %1043 = vmatprep.subr.mxu0 0.0
        %1044 = vmatpush1.msra.mxu0 0.0
        %1045 = vmatprep.subr.mxu0 0.0
        %1046 = vmatpush1.msra.mxu0 0.0
        %1047 = vmatprep.subr.mxu0 0.0
        %1048 = vmatpush1.msra.mxu0 0.0
        %1049 = vmatprep.subr.mxu0 0.0
        %1050 = vmatpush1.msra.mxu0 0.0
        %1051 = vmatprep.subr.mxu0 0.0
        %1052 = vmatpush1.msra.mxu0 0.0
        %1053 = vmatprep.subr.mxu0 0.0
        %1054 = vmatpush1.msra.mxu0 0.0
        %1055 = vmatprep.mubr.f32.mxu0 0.0
        %1056 = vmatmul.mubr.f32.gmra.mrb[0].mxu0 %v989
        %v1057 = vpop.f32.mrb[0].mxu0
        %v1058 = vadd.f32 0.0, %v1057
        %v1059 = vpop.f32.mrb[0].mxu0
        %1060 = vdwg.mxu0
        %v1061 = vrcp.pop %v983
        %v1062 = vmul.f32 %v1058, %v1061
        %v1063 = vld [vmem:[#allocation3 + $0x10] sm:$0xff]
        %1064 = vrot.lane.b32.xlu0 %v732, 112
        %v1065 = vpop.permute.xlu0 %1064
        %v1066 = vsel %vm741, %v1065, 0
        %1068 = vmatprep.subr.mxu0 0.0
        %1069 = vmatpush1.msra.mxu0 %v1063
        %1070 = vmatprep.subr.mxu0 0.0
        %1071 = vmatpush1.msra.mxu0 0.0
        %1072 = vmatprep.subr.mxu0 0.0
        %1073 = vmatpush1.msra.mxu0 0.0
        %1074 = vmatprep.subr.mxu0 0.0
        %1075 = vmatpush1.msra.mxu0 0.0
        %1076 = vmatprep.subr.mxu0 0.0
        %1077 = vmatpush1.msra.mxu0 0.0
        %1078 = vmatprep.subr.mxu0 0.0
        %1079 = vmatpush1.msra.mxu0 0.0
        %1080 = vmatprep.subr.mxu0 0.0
        %1081 = vmatpush1.msra.mxu0 0.0
        %1082 = vmatprep.subr.mxu0 0.0
        %1083 = vmatpush1.msra.mxu0 0.0
        %1084 = vmatprep.subr.mxu0 0.0
        %1085 = vmatpush1.msra.mxu0 0.0
        %1086 = vmatprep.subr.mxu0 0.0
        %1087 = vmatpush1.msra.mxu0 0.0
        %1088 = vmatprep.subr.mxu0 0.0
        %1089 = vmatpush1.msra.mxu0 0.0
        %1090 = vmatprep.subr.mxu0 0.0
        %1091 = vmatpush1.msra.mxu0 0.0
        %1092 = vmatprep.subr.mxu0 0.0
        %1093 = vmatpush1.msra.mxu0 0.0
        %1094 = vmatprep.subr.mxu0 0.0
        %1095 = vmatpush1.msra.mxu0 0.0
        %1096 = vmatprep.subr.mxu0 0.0
        %1097 = vmatpush1.msra.mxu0 0.0
        %1098 = vmatprep.subr.mxu0 0.0
        %1099 = vmatpush1.msra.mxu0 0.0
        %1100 = vmatprep.subr.mxu0 0.0
        %1101 = vmatpush1.msra.mxu0 0.0
        %1102 = vmatprep.subr.mxu0 0.0
        %1103 = vmatpush1.msra.mxu0 0.0
        %1104 = vmatprep.subr.mxu0 0.0
        %1105 = vmatpush1.msra.mxu0 0.0
        %1106 = vmatprep.subr.mxu0 0.0
        %1107 = vmatpush1.msra.mxu0 0.0
        %1108 = vmatprep.subr.mxu0 0.0
        %1109 = vmatpush1.msra.mxu0 0.0
        %1110 = vmatprep.subr.mxu0 0.0
        %1111 = vmatpush1.msra.mxu0 0.0
        %1112 = vmatprep.subr.mxu0 0.0
        %1113 = vmatpush1.msra.mxu0 0.0
        %1114 = vmatprep.subr.mxu0 0.0
        %1115 = vmatpush1.msra.mxu0 0.0
        %1116 = vmatprep.subr.mxu0 0.0
        %1117 = vmatpush1.msra.mxu0 0.0
        %1118 = vmatprep.subr.mxu0 0.0
        %1119 = vmatpush1.msra.mxu0 0.0
        %1120 = vmatprep.subr.mxu0 0.0
        %1121 = vmatpush1.msra.mxu0 0.0
        %1122 = vmatprep.subr.mxu0 0.0
        %1123 = vmatpush1.msra.mxu0 0.0
        %1124 = vmatprep.subr.mxu0 0.0
        %1125 = vmatpush1.msra.mxu0 0.0
        %1126 = vmatprep.subr.mxu0 0.0
        %1127 = vmatpush1.msra.mxu0 0.0
        %1128 = vmatprep.subr.mxu0 0.0
        %1129 = vmatpush1.msra.mxu0 0.0
        %1130 = vmatprep.subr.mxu0 0.0
        %1131 = vmatpush1.msra.mxu0 0.0
        %1132 = vmatprep.mubr.f32.mxu0 0.0
        %1133 = vmatmul.mubr.f32.gmra.mrb[0].mxu0 %v1066
        %v1134 = vpop.f32.mrb[0].mxu0
        %v1135 = vadd.f32 %v739, %v1134
        %v1136 = vpop.f32.mrb[0].mxu0
        %1137 = vdwg.mxu0
        %v1138 = vsel %vm741, %v1135, -inf
        %1139 = vmax.xlane.f32.xlu0 %v1138
        %v1140 = vpop.xlane.xlu0 %1139
        %v1141 = vsub.f32 %v1135, %v1140
        %v1142 = vmul.f32 %v1141, 1.442695
        %v1143 = vpow.pop %v1142
        %v1144 = vsel %vm741, %v1143, 0.0
        %1145 = vadd.xlane.f32.xlu0 %v1144
        %v1146 = vpop.xlane.xlu0 %1145
        %1147 = vrot.lane.b32.xlu0 %v824, 112
        %v1148 = vpop.permute.xlu0 %1147
        %v1151 = vsel %vm741, %v1143, 0
        %1153 = vmatprep.subr.mxu0 0.0
        %1154 = vmatpush1.msra.mxu0 %v1148
        %1155 = vmatprep.subr.mxu0 0.0
        %1156 = vmatpush1.msra.mxu0 0.0
        %1157 = vmatprep.subr.mxu0 0.0
        %1158 = vmatpush1.msra.mxu0 0.0
        %1159 = vmatprep.subr.mxu0 0.0
        %1160 = vmatpush1.msra.mxu0 0.0
        %1161 = vmatprep.subr.mxu0 0.0
        %1162 = vmatpush1.msra.mxu0 0.0
        %1163 = vmatprep.subr.mxu0 0.0
        %1164 = vmatpush1.msra.mxu0 0.0
        %1165 = vmatprep.subr.mxu0 0.0
        %1166 = vmatpush1.msra.mxu0 0.0
        %1167 = vmatprep.subr.mxu0 0.0
        %1168 = vmatpush1.msra.mxu0 0.0
        %1169 = vmatprep.subr.mxu0 0.0
        %1170 = vmatpush1.msra.mxu0 0.0
        %1171 = vmatprep.subr.mxu0 0.0
        %1172 = vmatpush1.msra.mxu0 0.0
        %1173 = vmatprep.subr.mxu0 0.0
        %1174 = vmatpush1.msra.mxu0 0.0
        %1175 = vmatprep.subr.mxu0 0.0
        %1176 = vmatpush1.msra.mxu0 0.0
        %1177 = vmatprep.subr.mxu0 0.0
        %1178 = vmatpush1.msra.mxu0 0.0
        %1179 = vmatprep.subr.mxu0 0.0
        %1180 = vmatpush1.msra.mxu0 0.0
        %1181 = vmatprep.subr.mxu0 0.0
        %1182 = vmatpush1.msra.mxu0 0.0
        %1183 = vmatprep.subr.mxu0 0.0
        %1184 = vmatpush1.msra.mxu0 0.0
        %1185 = vmatprep.subr.mxu0 0.0
        %1186 = vmatpush1.msra.mxu0 0.0
        %1187 = vmatprep.subr.mxu0 0.0
        %1188 = vmatpush1.msra.mxu0 0.0
        %1189 = vmatprep.subr.mxu0 0.0
        %1190 = vmatpush1.msra.mxu0 0.0
        %1191 = vmatprep.subr.mxu0 0.0
        %1192 = vmatpush1.msra.mxu0 0.0
        %1193 = vmatprep.subr.mxu0 0.0
        %1194 = vmatpush1.msra.mxu0 0.0
        %1195 = vmatprep.subr.mxu0 0.0
        %1196 = vmatpush1.msra.mxu0 0.0
        %1197 = vmatprep.subr.mxu0 0.0
        %1198 = vmatpush1.msra.mxu0 0.0
        %1199 = vmatprep.subr.mxu0 0.0
        %1200 = vmatpush1.msra.mxu0 0.0
        %1201 = vmatprep.subr.mxu0 0.0
        %1202 = vmatpush1.msra.mxu0 0.0
        %1203 = vmatprep.subr.mxu0 0.0
        %1204 = vmatpush1.msra.mxu0 0.0
        %1205 = vmatprep.subr.mxu0 0.0
        %1206 = vmatpush1.msra.mxu0 0.0
        %1207 = vmatprep.subr.mxu0 0.0
        %1208 = vmatpush1.msra.mxu0 0.0
        %1209 = vmatprep.subr.mxu0 0.0
        %1210 = vmatpush1.msra.mxu0 0.0
        %1211 = vmatprep.subr.mxu0 0.0
        %1212 = vmatpush1.msra.mxu0 0.0
        %1213 = vmatprep.subr.mxu0 0.0
        %1214 = vmatpush1.msra.mxu0 0.0
        %1215 = vmatprep.subr.mxu0 0.0
        %1216 = vmatpush1.msra.mxu0 0.0
        %1217 = vmatprep.mubr.f32.mxu0 0.0
        %1218 = vmatmul.mubr.f32.gmra.mrb[0].mxu0 %v1151
        %v1219 = vpop.f32.mrb[0].mxu0
        %v1220 = vadd.f32 0.0, %v1219
        %v1221 = vpop.f32.mrb[0].mxu0
        %1222 = vdwg.mxu0
        %v1223 = vrcp.pop %v1146
        %v1224 = vmul.f32 %v1220, %v1223
        %v1225 = vld [vmem:[#allocation3 + $0x18] sm:$0xff]
        %1226 = vrot.lane.b32.xlu0 %v732, 104
        %v1227 = vpop.permute.xlu0 %1226
        %v1228 = vsel %vm741, %v1227, 0
        %1230 = vmatprep.subr.mxu0 0.0
        %1231 = vmatpush1.msra.mxu0 %v1225
        %1232 = vmatprep.subr.mxu0 0.0
        %1233 = vmatpush1.msra.mxu0 0.0
        %1234 = vmatprep.subr.mxu0 0.0
        %1235 = vmatpush1.msra.mxu0 0.0
        %1236 = vmatprep.subr.mxu0 0.0
        %1237 = vmatpush1.msra.mxu0 0.0
        %1238 = vmatprep.subr.mxu0 0.0
        %1239 = vmatpush1.msra.mxu0 0.0
        %1240 = vmatprep.subr.mxu0 0.0
        %1241 = vmatpush1.msra.mxu0 0.0
        %1242 = vmatprep.subr.mxu0 0.0
        %1243 = vmatpush1.msra.mxu0 0.0
        %1244 = vmatprep.subr.mxu0 0.0
        %1245 = vmatpush1.msra.mxu0 0.0
        %1246 = vmatprep.subr.mxu0 0.0
        %1247 = vmatpush1.msra.mxu0 0.0
        %1248 = vmatprep.subr.mxu0 0.0
        %1249 = vmatpush1.msra.mxu0 0.0
        %1250 = vmatprep.subr.mxu0 0.0
        %1251 = vmatpush1.msra.mxu0 0.0
        %1252 = vmatprep.subr.mxu0 0.0
        %1253 = vmatpush1.msra.mxu0 0.0
        %1254 = vmatprep.subr.mxu0 0.0
        %1255 = vmatpush1.msra.mxu0 0.0
        %1256 = vmatprep.subr.mxu0 0.0
        %1257 = vmatpush1.msra.mxu0 0.0
        %1258 = vmatprep.subr.mxu0 0.0
        %1259 = vmatpush1.msra.mxu0 0.0
        %1260 = vmatprep.subr.mxu0 0.0
        %1261 = vmatpush1.msra.mxu0 0.0
        %1262 = vmatprep.subr.mxu0 0.0
        %1263 = vmatpush1.msra.mxu0 0.0
        %1264 = vmatprep.subr.mxu0 0.0
        %1265 = vmatpush1.msra.mxu0 0.0
        %1266 = vmatprep.subr.mxu0 0.0
        %1267 = vmatpush1.msra.mxu0 0.0
        %1268 = vmatprep.subr.mxu0 0.0
        %1269 = vmatpush1.msra.mxu0 0.0
        %1270 = vmatprep.subr.mxu0 0.0
        %1271 = vmatpush1.msra.mxu0 0.0
        %1272 = vmatprep.subr.mxu0 0.0
        %1273 = vmatpush1.msra.mxu0 0.0
        %1274 = vmatprep.subr.mxu0 0.0
        %1275 = vmatpush1.msra.mxu0 0.0
        %1276 = vmatprep.subr.mxu0 0.0
        %1277 = vmatpush1.msra.mxu0 0.0
        %1278 = vmatprep.subr.mxu0 0.0
        %1279 = vmatpush1.msra.mxu0 0.0
        %1280 = vmatprep.subr.mxu0 0.0
        %1281 = vmatpush1.msra.mxu0 0.0
        %1282 = vmatprep.subr.mxu0 0.0
        %1283 = vmatpush1.msra.mxu0 0.0
        %1284 = vmatprep.subr.mxu0 0.0
        %1285 = vmatpush1.msra.mxu0 0.0
        %1286 = vmatprep.subr.mxu0 0.0
        %1287 = vmatpush1.msra.mxu0 0.0
        %1288 = vmatprep.subr.mxu0 0.0
        %1289 = vmatpush1.msra.mxu0 0.0
        %1290 = vmatprep.subr.mxu0 0.0
        %1291 = vmatpush1.msra.mxu0 0.0
        %1292 = vmatprep.subr.mxu0 0.0
        %1293 = vmatpush1.msra.mxu0 0.0
        %1294 = vmatprep.mubr.f32.mxu0 0.0
        %1295 = vmatmul.mubr.f32.gmra.mrb[0].mxu0 %v1228
        %v1296 = vpop.f32.mrb[0].mxu0
        %v1297 = vadd.f32 %v739, %v1296
        %v1298 = vpop.f32.mrb[0].mxu0
        %1299 = vdwg.mxu0
        %v1300 = vsel %vm741, %v1297, -inf
        %1301 = vmax.xlane.f32.xlu0 %v1300
        %v1302 = vpop.xlane.xlu0 %1301
        %v1303 = vsub.f32 %v1297, %v1302
        %v1304 = vmul.f32 %v1303, 1.442695
        %v1305 = vpow.pop %v1304
        %v1306 = vsel %vm741, %v1305, 0.0
        %1307 = vadd.xlane.f32.xlu0 %v1306
        %v1308 = vpop.xlane.xlu0 %1307
        %1309 = vrot.lane.b32.xlu0 %v824, 104
        %v1310 = vpop.permute.xlu0 %1309
        %v1313 = vsel %vm741, %v1305, 0
        %1315 = vmatprep.subr.mxu0 0.0
        %1316 = vmatpush1.msra.mxu0 %v1310
        %1317 = vmatprep.subr.mxu0 0.0
        %1318 = vmatpush1.msra.mxu0 0.0
        %1319 = vmatprep.subr.mxu0 0.0
        %1320 = vmatpush1.msra.mxu0 0.0
        %1321 = vmatprep.subr.mxu0 0.0
        %1322 = vmatpush1.msra.mxu0 0.0
        %1323 = vmatprep.subr.mxu0 0.0
        %1324 = vmatpush1.msra.mxu0 0.0
        %1325 = vmatprep.subr.mxu0 0.0
        %1326 = vmatpush1.msra.mxu0 0.0
        %1327 = vmatprep.subr.mxu0 0.0
        %1328 = vmatpush1.msra.mxu0 0.0
        %1329 = vmatprep.subr.mxu0 0.0
        %1330 = vmatpush1.msra.mxu0 0.0
        %1331 = vmatprep.subr.mxu0 0.0
        %1332 = vmatpush1.msra.mxu0 0.0
        %1333 = vmatprep.subr.mxu0 0.0
        %1334 = vmatpush1.msra.mxu0 0.0
        %1335 = vmatprep.subr.mxu0 0.0
        %1336 = vmatpush1.msra.mxu0 0.0
        %1337 = vmatprep.subr.mxu0 0.0
        %1338 = vmatpush1.msra.mxu0 0.0
        %1339 = vmatprep.subr.mxu0 0.0
        %1340 = vmatpush1.msra.mxu0 0.0
        %1341 = vmatprep.subr.mxu0 0.0
        %1342 = vmatpush1.msra.mxu0 0.0
        %1343 = vmatprep.subr.mxu0 0.0
        %1344 = vmatpush1.msra.mxu0 0.0
        %1345 = vmatprep.subr.mxu0 0.0
        %1346 = vmatpush1.msra.mxu0 0.0
        %1347 = vmatprep.subr.mxu0 0.0
        %1348 = vmatpush1.msra.mxu0 0.0
        %1349 = vmatprep.subr.mxu0 0.0
        %1350 = vmatpush1.msra.mxu0 0.0
        %1351 = vmatprep.subr.mxu0 0.0
        %1352 = vmatpush1.msra.mxu0 0.0
        %1353 = vmatprep.subr.mxu0 0.0
        %1354 = vmatpush1.msra.mxu0 0.0
        %1355 = vmatprep.subr.mxu0 0.0
        %1356 = vmatpush1.msra.mxu0 0.0
        %1357 = vmatprep.subr.mxu0 0.0
        %1358 = vmatpush1.msra.mxu0 0.0
        %1359 = vmatprep.subr.mxu0 0.0
        %1360 = vmatpush1.msra.mxu0 0.0
        %1361 = vmatprep.subr.mxu0 0.0
        %1362 = vmatpush1.msra.mxu0 0.0
        %1363 = vmatprep.subr.mxu0 0.0
        %1364 = vmatpush1.msra.mxu0 0.0
        %1365 = vmatprep.subr.mxu0 0.0
        %1366 = vmatpush1.msra.mxu0 0.0
        %1367 = vmatprep.subr.mxu0 0.0
        %1368 = vmatpush1.msra.mxu0 0.0
        %1369 = vmatprep.subr.mxu0 0.0
        %1370 = vmatpush1.msra.mxu0 0.0
        %1371 = vmatprep.subr.mxu0 0.0
        %1372 = vmatpush1.msra.mxu0 0.0
        %1373 = vmatprep.subr.mxu0 0.0
        %1374 = vmatpush1.msra.mxu0 0.0
        %1375 = vmatprep.subr.mxu0 0.0
        %1376 = vmatpush1.msra.mxu0 0.0
        %1377 = vmatprep.subr.mxu0 0.0
        %1378 = vmatpush1.msra.mxu0 0.0
        %1379 = vmatprep.mubr.f32.mxu0 0.0
        %1380 = vmatmul.mubr.f32.gmra.mrb[0].mxu0 %v1313
        %v1381 = vpop.f32.mrb[0].mxu0
        %v1382 = vadd.f32 0.0, %v1381
        %v1383 = vpop.f32.mrb[0].mxu0
        %1384 = vdwg.mxu0
        %v1385 = vrcp.pop %v1308
        %v1386 = vmul.f32 %v1382, %v1385
        %1388 = vrot.lane.b32.xlu0 %v1062, 8
        %v1389 = vpop.permute.xlu0 %1388
        %1392 = vrot.lane.b32.xlu0 %v1224, 16
        %v1393 = vpop.permute.xlu0 %1392
        %1396 = vrot.lane.b32.xlu0 %v1386, 24
        %v1397 = vpop.permute.xlu0 %1396
        %v1399 = vsel %vm741, %v899, %v1389
        %vm1400 = vcmask 130048
        %v1401 = vsel %vm1400, %v1399, %v1393
        %vm1402 = vcmask 195584
        %v1403 = vsel %vm1402, %v1401, %v1397
        %v1404 = vld [vmem:[#allocation13] sm:$0xff]
        %v1405 = vld [vmem:[#allocation13 + $0x8] sm:$0xff]
        %v1406 = vld [vmem:[#allocation13 + $0x10] sm:$0xff]
        %v1407 = vld [vmem:[#allocation13 + $0x18] sm:$0xff]
        %v1408 = vld [vmem:[%s8] sm:$0x1]
        %v1410 = vlaneseq
        %v1411 = vshrl.u32 %v1410, 7
        %v1412 = vsub.s32 0, %v1411
        %v1413 = vrot.slane %v1408, %v1412
        %vm1415 = vcmask 261120
        %v1417 = vsel %vm1415, %v1403, 0
        %1419 = vmatprep.subr.mxu0 0.0
        %1420 = vmatpush1.msra.mxu0 %v1404
        %1421 = vmatprep.subr.mxu0 0.0
        %1422 = vmatpush1.msra.mxu0 %v1405
        %1423 = vmatprep.subr.mxu0 0.0
        %1424 = vmatpush1.msra.mxu0 %v1406
        %1425 = vmatprep.subr.mxu0 0.0
        %1426 = vmatpush1.msra.mxu0 %v1407
        %1427 = vmatprep.subr.mxu0 0.0
        %1428 = vmatpush1.msra.mxu0 0.0
        %1429 = vmatprep.subr.mxu0 0.0
        %1430 = vmatpush1.msra.mxu0 0.0
        %1431 = vmatprep.subr.mxu0 0.0
        %1432 = vmatpush1.msra.mxu0 0.0
        %1433 = vmatprep.subr.mxu0 0.0
        %1434 = vmatpush1.msra.mxu0 0.0
        %1435 = vmatprep.subr.mxu0 0.0
        %1436 = vmatpush1.msra.mxu0 0.0
        %1437 = vmatprep.subr.mxu0 0.0
        %1438 = vmatpush1.msra.mxu0 0.0
        %1439 = vmatprep.subr.mxu0 0.0
        %1440 = vmatpush1.msra.mxu0 0.0
        %1441 = vmatprep.subr.mxu0 0.0
        %1442 = vmatpush1.msra.mxu0 0.0
        %1443 = vmatprep.subr.mxu0 0.0
        %1444 = vmatpush1.msra.mxu0 0.0
        %1445 = vmatprep.subr.mxu0 0.0
        %1446 = vmatpush1.msra.mxu0 0.0
        %1447 = vmatprep.subr.mxu0 0.0
        %1448 = vmatpush1.msra.mxu0 0.0
        %1449 = vmatprep.subr.mxu0 0.0
        %1450 = vmatpush1.msra.mxu0 0.0
        %1451 = vmatprep.subr.mxu0 0.0
        %1452 = vmatpush1.msra.mxu0 0.0
        %1453 = vmatprep.subr.mxu0 0.0
        %1454 = vmatpush1.msra.mxu0 0.0
        %1455 = vmatprep.subr.mxu0 0.0
        %1456 = vmatpush1.msra.mxu0 0.0
        %1457 = vmatprep.subr.mxu0 0.0
        %1458 = vmatpush1.msra.mxu0 0.0
        %1459 = vmatprep.subr.mxu0 0.0
        %1460 = vmatpush1.msra.mxu0 0.0
        %1461 = vmatprep.subr.mxu0 0.0
        %1462 = vmatpush1.msra.mxu0 0.0
        %1463 = vmatprep.subr.mxu0 0.0
        %1464 = vmatpush1.msra.mxu0 0.0
        %1465 = vmatprep.subr.mxu0 0.0
        %1466 = vmatpush1.msra.mxu0 0.0
        %1467 = vmatprep.subr.mxu0 0.0
        %1468 = vmatpush1.msra.mxu0 0.0
        %1469 = vmatprep.subr.mxu0 0.0
        %1470 = vmatpush1.msra.mxu0 0.0
        %1471 = vmatprep.subr.mxu0 0.0
        %1472 = vmatpush1.msra.mxu0 0.0
        %1473 = vmatprep.subr.mxu0 0.0
        %1474 = vmatpush1.msra.mxu0 0.0
        %1475 = vmatprep.subr.mxu0 0.0
        %1476 = vmatpush1.msra.mxu0 0.0
        %1477 = vmatprep.subr.mxu0 0.0
        %1478 = vmatpush1.msra.mxu0 0.0
        %1479 = vmatprep.subr.mxu0 0.0
        %1480 = vmatpush1.msra.mxu0 0.0
        %1481 = vmatprep.subr.mxu0 0.0
        %1482 = vmatpush1.msra.mxu0 0.0
        %1483 = vmatprep.mubr.f32.mxu0 0.0
        %1484 = vmatmul.mubr.f32.gmra.mrb[0].mxu0 %v1417
        %v1485 = vpop.f32.mrb[0].mxu0
        %v1486 = vadd.f32 %v1413, %v1485
        %v1487 = vpop.f32.mrb[0].mxu0
        %1488 = vdwg.mxu0
        %s1489 = scalar_lea.vmem %s439, %s730 [#allocation5]
        %v1490 = vld [vmem:[%s1489] sm:$0xff]
        %v1491 = vadd.f32 %v1486, %v1490
        %v1492 = vsel %vm1415, %v1491, 0.0
        %1493 = vadd.xlane.f32.xlu0 %v1492
        %v1494 = vpop.xlane.xlu0 %1493
        %v1495 = vrcp.pop 32.0
        %v1496 = vmul.f32 %v1494, %v1495
        %v1497 = vsub.f32 %v1491, %v1496
        %v1498 = vmul.f32 %v1497, %v1497
        %v1499 = vsel %vm1415, %v1498, 0.0
        %1500 = vadd.xlane.f32.xlu0 %v1499
        %v1501 = vpop.xlane.xlu0 %1500
        %v1502 = vmul.f32 %v1501, %v1495
        %v1503 = vadd.f32 %v1502, 1e-05
        %v1504 = vrsqrt.pop %v1503
        %v1505 = vmul.f32 %v1497, %v1504
        %v1506 = vld [vmem:[%s9] sm:$0x1]
        %v1508 = vlaneseq
        %v1509 = vshrl.u32 %v1508, 7
        %v1510 = vsub.s32 0, %v1509
        %v1511 = vrot.slane %v1506, %v1510
        %v1513 = vmul.f32 %v1505, %v1511
        %v1514 = vld [vmem:[%s10] sm:$0x1]
        %v1516 = vlaneseq
        %v1517 = vshrl.u32 %v1516, 7
        %v1518 = vsub.s32 0, %v1517
        %v1519 = vrot.slane %v1514, %v1518
        %v1521 = vadd.f32 %v1513, %v1519
        %1522 = vst.msk [vmem:[%s506] sm:$0xff] %vm1415, %v1521
        %s1523 = sand.u32 %s300, 1
        %s1524 = scalar_lea.sflag [#allocation7], %s1523
        %s1525 = sand.u32 %s300, 1
        %s1526 = smul.addr %s1525, 8
        %s1527 = scalar_lea.vmem [#allocation14], %s1526
        // Predicated region
        $region89: #{tpu_custom_call.1} parent=63 // pred_check
          %p1528 = pneg %p310
        $region90: #{tpu_custom_call.1} parent=63 // pred_check_branch
          %1530 = sbr.rel (%p1528) target = $region92
        $region91: #{tpu_custom_call.1} parent=63 // pred_region
          %s1532 = ssub.s32 128, 128
          %1533 = vsyncadd %s1524, %s1532
          %s1534 = sadd.s32 %s37, %s36
          %s1535 = smul.addr %s1534, 128
          %s1536 = scalar_lea.hbm %s11, %s1535
          %s1538 = sshll.u32 %s1527, 4
          %s1539 = int_to_ptr.vmem [resolvable:$true] %s1538
          %1541 = dma.vmem_to_hbm [thread:$0]  %s1539, 128, %s1536, %s1524
        $region92: #{tpu_custom_call.1} parent=63 // pred_fallthru
          _
      $region64: #{tpu_custom_call.1} parent=5 // pred_fallthru
        _
      %p1542 = scmp.le.s32.totalorder 2, %s27
      // Predicated region
      $region93: #{tpu_custom_call.1} parent=5 // pred_check
        %p1543 = pneg %p1542
      $region94: #{tpu_custom_call.1} parent=5 // pred_check_branch
        %1545 = sbr.rel (%p1543) target = $region96
      $region95: #{tpu_custom_call.1} parent=5 // pred_region
        %s1546 = ssub.s32 %s27, 2
        // Predicated region
        $region97: #{tpu_custom_call.1} parent=95 // pred_check
          %p1547 = pneg %p316
        $region98: #{tpu_custom_call.1} parent=95 // pred_check_branch
          %1549 = sbr.rel (%p1547) target = $region100
        $region99: #{tpu_custom_call.1} parent=95 // pred_region
          %s1550 = sand.u32 %s301, 1
          %s1551 = scalar_lea.sflag [#allocation7], %s1550
          %s1552 = sand.u32 %s301, 1
          %s1553 = smul.addr %s1552, 8
          %s1554 = scalar_lea.vmem [#allocation14], %s1553
          %1555 = dma.done %s1551, 128
        $region100: #{tpu_custom_call.1} parent=95 // pred_fallthru
          _
      $region96: #{tpu_custom_call.1} parent=5 // pred_fallthru
        _
    $region6: #{tpu_custom_call.1} parent=1 // loop_footer
      %s31 = sadd.s32 1, %s27
    $region7: #{tpu_custom_call.1} parent=1 // loop_footer_branch
      %26 = sbr.rel target = $region3
    $region8: #{tpu_custom_call.1} parent=1 // loop_exit
      _
    %1556 = vsyncpa [#allocation6], 1
    %s1557 = scalar_lea.sflag [#allocation6], 1
    %1558 = vsyncpa %s1557, 1
    %1559 = vsyncpa [#allocation9], 1
    %s1560 = scalar_lea.sflag [#allocation9], 1
    %1561 = vsyncpa %s1560, 1
    %1562 = vsyncpa [#allocation12], 1
    %1563 = vsyncpa [#allocation7], 1
    %s1564 = scalar_lea.sflag [#allocation7], 1
    %1565 = vsyncpa %s1564, 1

</llo_original>
